<compile_context>
chip_gen: v7x
topology: tpu7x:2x2x1
jax: 0.10.0
libtpu: 0.0.40
codegen_flags: <defaults>
</compile_context>

<pallas_src>
import functools

import jax
import jax.numpy as jnp
from jax.experimental import pallas as pl
from jax.experimental.pallas import tpu as pltpu


def _pointnet_kernel(x_ref, w1_ref, b1_ref, w2_ref, b2_ref, w3_ref, out_ref,
                     *, chunk):
    # x_ref : (3, tile_n)  f32   channel-major point tile (one batch element)
    # w1_ref: (64, 3)      f32   b1_ref: (64, 1)  f32
    # w2_ref: (128, 64)    bf16  b2_ref: (128, 1) f32
    # w3_ref: (1024, 128)  bf16  (b3 is added in the wrapper)
    # out_ref: (1024, 1)   f32   partial max over this point tile
    x = x_ref[...]                                       # (3, T) f32
    w1 = w1_ref[...]                                     # (64, 3) f32

    # ---- layer 1: 3 -> 64 on the VPU (channel-major broadcast FMAs; a K=3
    #      matmul would waste the MXU, and (64, T) vregs are fully dense) ----
    h1 = (w1[:, 0:1] * x[0:1, :]
          + w1[:, 1:2] * x[1:2, :]
          + w1[:, 2:3] * x[2:3, :]
          + b1_ref[...])
    h1 = jnp.maximum(h1, 0.0).astype(jnp.bfloat16)       # (64, T)

    w2 = w2_ref[...]
    b2 = b2_ref[...]
    w3 = w3_ref[...]
    n_chunks = h1.shape[1] // chunk

    def chunk_fold(c):
        # Static, 128-aligned lane slices -> layout-free.
        h1_c = h1[:, c * chunk:(c + 1) * chunk]          # (64, chunk) bf16
        # ---- layer 2: 64 -> 128, MXU, bf16 operands, f32 accumulate -------
        h2 = jnp.dot(w2, h1_c, preferred_element_type=jnp.float32) + b2
        h2 = jnp.maximum(h2, 0.0).astype(jnp.bfloat16)   # (128, chunk)
        # ---- layer 3: 128 -> 1024, MXU; bias hoisted to the wrapper -------
        h3 = jnp.dot(w3, h2, preferred_element_type=jnp.float32)  # (1024, chunk)
        # stage-1 reduce: pure VPU vreg-wise maxima down to 128 lanes
        fold = h3[:, 0:128]
        for j in range(1, chunk // 128):
            fold = jnp.maximum(fold, h3[:, j * 128:(j + 1) * 128])
        return fold                                      # (1024, 128) f32

    # Value-carried running max: the dependence chain through `part` plus
    # chunk <= tile_n/4 keeps live layer-3 temporaries bounded (<= 8 MiB).
    part = chunk_fold(0)
    for c in range(1, n_chunks):
        part = jnp.maximum(part, chunk_fold(c))

    # stage-2 reduce: one XLU lane reduce per grid step.
    out_ref[...] = jnp.max(part, axis=1, keepdims=True)  # (1024, 1)


def pointnetfeat_forward(x_ncl, params, *, tile_n=None, chunk=None):
    """x_ncl: (B, 3, N) float32 (PyTorch NCL layout). Returns (B, 1024) f32."""
    B, C, N = x_ncl.shape
    assert C == 3
    x_ncl = x_ncl.astype(jnp.float32)
    w1, b1, w2, b2, w3, b3 = params

    # ---- tile selection: minimize padded N, prefer the largest tile -------
    if tile_n is None:
        cands = (2048, 1024, 512, 256, 128)
        padded = [pl.cdiv(N, t) * t for t in cands]
        best = min(padded)
        tile_n = max(t for t, p in zip(cands, padded) if p == best)
    assert tile_n % 128 == 0
    n_pad = pl.cdiv(N, tile_n) * tile_n
    if n_pad != N:
        # Duplicate the last point; max over points is invariant to duplicates.
        x_ncl = jnp.pad(x_ncl, ((0, 0), (0, 0), (0, n_pad - N)), mode="edge")
    if chunk is None:
        chunk = min(512, tile_n)
    assert tile_n % chunk == 0 and chunk % 128 == 0
    n_steps = n_pad // tile_n

    # bf16 operands for the MXU layers; biases & accumulation stay f32.
    w2b = w2.astype(jnp.bfloat16)
    w3b = w3.astype(jnp.bfloat16)

    const_spec = lambda a: pl.BlockSpec(a.shape, lambda b, n: (0, 0))

    flops = 2 * B * n_pad * (3 * 64 + 64 * 128 + 128 * 1024)
    bytes_accessed = int(x_ncl.size * 4 + B * n_steps * 1024 * 4
                         + w1.size * 4 + b1.size * 4 + w2b.size * 2
                         + b2.size * 4 + w3b.size * 2)

    partials = pl.pallas_call(
        functools.partial(_pointnet_kernel, chunk=chunk),
        out_shape=jax.ShapeDtypeStruct((B, n_steps, 1024, 1), jnp.float32),
        grid_spec=pltpu.PrefetchScalarGridSpec(
            num_scalar_prefetch=0,
            grid=(B, n_steps),
            in_specs=[
                # channel-major input block: lane-dense, ~8*tile_n*4 B in VMEM
                pl.BlockSpec((None, 3, tile_n), lambda b, n: (b, 0, n)),
                const_spec(w1), const_spec(b1),
                const_spec(w2b), const_spec(b2),
                const_spec(w3b),
            ],
            out_specs=pl.BlockSpec((None, None, 1024, 1),
                                   lambda b, n: (b, n, 0, 0)),
        ),
        compiler_params=pltpu.CompilerParams(
            dimension_semantics=("parallel", "parallel"),
            vmem_limit_bytes=32 * 1024 * 1024),
        cost_estimate=pl.CostEstimate(flops=flops, transcendentals=0,
                                      bytes_accessed=bytes_accessed),
    )(x_ncl, w1, b1, w2b, b2, w3b)

    # Cross-tile max + hoisted b3 bias (max_t(h)+b3 == max_t(h+b3)).
    feat = jnp.max(partials[..., 0], axis=1)              # (B, 1024)
    return feat + jnp.reshape(b3, (1, 1024))


def _fold_bn(conv_w, conv_b, gamma, beta, mean, var, eps=1e-5):
    """Fold BatchNorm1d (inference) into a 1x1 Conv1d.

    conv_w: (Cout, Cin), conv_b: (Cout,).
    Returns channel-major weight (Cout, Cin) f32 and column bias (Cout, 1) f32.
    """
    scale = gamma / jnp.sqrt(var + eps)                  # (Cout,)
    w_eff = conv_w * scale[:, None]                      # (Cout, Cin)
    b_eff = (conv_b - mean) * scale + beta               # (Cout,)
    return w_eff, b_eff[:, None]


def make_params(key):
    dims = [(3, 64), (64, 128), (128, 1024)]
    params = []
    for i, (cin, cout) in enumerate(dims):
        ks = jax.random.split(jax.random.fold_in(key, i), 6)
        conv_w = jax.random.normal(ks[0], (cout, cin), jnp.float32) * 0.1
        conv_b = jax.random.normal(ks[1], (cout,), jnp.float32) * 0.1
        gamma = 1.0 + 0.1 * jax.random.normal(ks[2], (cout,), jnp.float32)
        beta = 0.1 * jax.random.normal(ks[3], (cout,), jnp.float32)
        mean = 0.1 * jax.random.normal(ks[4], (cout,), jnp.float32)
        var = jnp.abs(jax.random.normal(ks[5], (cout,), jnp.float32)) + 0.5
        w, b = _fold_bn(conv_w, conv_b, gamma, beta, mean, var)
        params.extend([w, b])
    return tuple(params)


def _reference(x_ncl, params):
    """Plain-JAX f32 reference matching the PyTorch forward (inference BN)."""
    w1, b1, w2, b2, w3, b3 = params                      # (Cout,Cin), (Cout,1)
    h = jnp.maximum(jnp.einsum('oc,bcn->bon', w1, x_ncl) + b1[None], 0.0)
    h = jnp.maximum(jnp.einsum('oc,bcn->bon', w2, h) + b2[None], 0.0)
    h = jnp.einsum('oc,bcn->bon', w3, h) + b3[None]
    return jnp.max(h, axis=2)                            # (B, 1024)


if __name__ == "__main__":
    # TODO(synk): training-mode BatchNorm statistics are not represented
    # (BN is folded with inference running-stats semantics).
    key = jax.random.PRNGKey(0)
    B, N = 2, 300                                        # small; exercises point padding
    x = jax.random.normal(jax.random.fold_in(key, 100), (B, 3, N), jnp.float32)
    params = make_params(key)

    out = pointnetfeat_forward(x, params)
    out = jax.block_until_ready(out)

    ref = _reference(x, params)
    assert out.shape == (B, 1024)
    # bf16 MXU operands => loosened tolerance vs the f32 reference.
    assert jnp.allclose(out, ref, atol=2e-2, rtol=2e-2), "mismatch vs reference"
    print("KERNEL_OK")
</pallas_src>

<mosaic_0001>
module attributes {stable_mosaic.version = 11 : i64} {
  func.func @_pointnet_kernel(%arg0: i32, %arg1: i32, %arg2: memref<1x3x128xf32, #tpu.memory_space<vmem>>, %arg3: memref<64x3xf32, #tpu.memory_space<vmem>>, %arg4: memref<64x1xf32, #tpu.memory_space<vmem>>, %arg5: memref<128x64xbf16, #tpu.memory_space<vmem>>, %arg6: memref<128x1xf32, #tpu.memory_space<vmem>>, %arg7: memref<1024x128xbf16, #tpu.memory_space<vmem>>, %arg8: memref<1x1x1024x1xf32, #tpu.memory_space<vmem>>) attributes {dimension_semantics = [#tpu.dimension_semantics<parallel>, #tpu.dimension_semantics<parallel>], iteration_bounds = array<i64: 2, 3>, scalar_prefetch = 0 : i64, scratch_operands = 0 : i64, tpu.core_type = #tpu.core_type<tc>, window_params = [{transform_indices = @transform_0, window_bounds = array<i64: 1, 3, 128>}, {pipeline_mode = #tpu.pipeline_mode<synchronous>, transform_indices = @transform_1, window_bounds = array<i64: 64, 3>}, {pipeline_mode = #tpu.pipeline_mode<synchronous>, transform_indices = @transform_2, window_bounds = array<i64: 64, 1>}, {pipeline_mode = #tpu.pipeline_mode<synchronous>, transform_indices = @transform_3, window_bounds = array<i64: 128, 64>}, {pipeline_mode = #tpu.pipeline_mode<synchronous>, transform_indices = @transform_4, window_bounds = array<i64: 128, 1>}, {pipeline_mode = #tpu.pipeline_mode<synchronous>, transform_indices = @transform_5, window_bounds = array<i64: 1024, 128>}, {transform_indices = @transform_6, window_bounds = array<i64: 1, 1, 1024, 1>}]} {
    %c0 = arith.constant 0 : index
    %c0_0 = arith.constant 0 : index
    %c0_1 = arith.constant 0 : index
    %0 = vector.load %arg2[%c0, %c0_0, %c0_1] : memref<1x3x128xf32, #tpu.memory_space<vmem>>, vector<1x3x128xf32>
    %1 = vector.shape_cast %0 : vector<1x3x128xf32> to vector<3x128xf32>
    %c0_2 = arith.constant 0 : index
    %c0_3 = arith.constant 0 : index
    %2 = vector.load %arg3[%c0_2, %c0_3] : memref<64x3xf32, #tpu.memory_space<vmem>>, vector<64x3xf32>
    %3 = vector.extract_strided_slice %2 {offsets = [0, 0], sizes = [64, 1], strides = [1, 1]} : vector<64x3xf32> to vector<64x1xf32>
    %4 = vector.extract_strided_slice %1 {offsets = [0, 0], sizes = [1, 128], strides = [1, 1]} : vector<3x128xf32> to vector<1x128xf32>
    %5 = vector.broadcast %3 : vector<64x1xf32> to vector<64x128xf32>
    %6 = vector.broadcast %4 : vector<1x128xf32> to vector<64x128xf32>
    %7 = arith.mulf %5, %6 : vector<64x128xf32>
    %8 = vector.extract_strided_slice %2 {offsets = [0, 1], sizes = [64, 1], strides = [1, 1]} : vector<64x3xf32> to vector<64x1xf32>
    %9 = vector.extract_strided_slice %1 {offsets = [1, 0], sizes = [1, 128], strides = [1, 1]} : vector<3x128xf32> to vector<1x128xf32>
    %10 = vector.broadcast %8 : vector<64x1xf32> to vector<64x128xf32>
    %11 = vector.broadcast %9 : vector<1x128xf32> to vector<64x128xf32>
    %12 = arith.mulf %10, %11 : vector<64x128xf32>
    %13 = arith.addf %7, %12 : vector<64x128xf32>
    %14 = vector.extract_strided_slice %2 {offsets = [0, 2], sizes = [64, 1], strides = [1, 1]} : vector<64x3xf32> to vector<64x1xf32>
    %15 = vector.extract_strided_slice %1 {offsets = [2, 0], sizes = [1, 128], strides = [1, 1]} : vector<3x128xf32> to vector<1x128xf32>
    %16 = vector.broadcast %14 : vector<64x1xf32> to vector<64x128xf32>
    %17 = vector.broadcast %15 : vector<1x128xf32> to vector<64x128xf32>
    %18 = arith.mulf %16, %17 : vector<64x128xf32>
    %19 = arith.addf %13, %18 : vector<64x128xf32>
    %c0_4 = arith.constant 0 : index
    %c0_5 = arith.constant 0 : index
    %20 = vector.load %arg4[%c0_4, %c0_5] : memref<64x1xf32, #tpu.memory_space<vmem>>, vector<64x1xf32>
    %21 = vector.broadcast %20 : vector<64x1xf32> to vector<64x128xf32>
    %22 = arith.addf %19, %21 : vector<64x128xf32>
    %cst = arith.constant 0.000000e+00 : f32
    %23 = vector.broadcast %cst : f32 to vector<64x128xf32>
    %24 = arith.maximumf %22, %23 : vector<64x128xf32>
    %25 = arith.truncf %24 : vector<64x128xf32> to vector<64x128xbf16>
    %c0_6 = arith.constant 0 : index
    %c0_7 = arith.constant 0 : index
    %26 = vector.load %arg5[%c0_6, %c0_7] : memref<128x64xbf16, #tpu.memory_space<vmem>>, vector<128x64xbf16>
    %c0_8 = arith.constant 0 : index
    %c0_9 = arith.constant 0 : index
    %27 = vector.load %arg6[%c0_8, %c0_9] : memref<128x1xf32, #tpu.memory_space<vmem>>, vector<128x1xf32>
    %c0_10 = arith.constant 0 : index
    %c0_11 = arith.constant 0 : index
    %28 = vector.load %arg7[%c0_10, %c0_11] : memref<1024x128xbf16, #tpu.memory_space<vmem>>, vector<1024x128xbf16>
    %cst_12 = arith.constant dense<0.000000e+00> : vector<128x128xf32>
    %29 = tpu.matmul %26, %25, %cst_12 {dimension_numbers = #tpu.dot_dimension_numbers<[1], [0], [0], [1], [0, 0, 1, 1], [], []>} : vector<128x64xbf16>, vector<64x128xbf16>, vector<128x128xf32> -> vector<128x128xf32>
    %30 = vector.broadcast %27 : vector<128x1xf32> to vector<128x128xf32>
    %31 = arith.addf %29, %30 : vector<128x128xf32>
    %cst_13 = arith.constant 0.000000e+00 : f32
    %32 = vector.broadcast %cst_13 : f32 to vector<128x128xf32>
    %33 = arith.maximumf %31, %32 : vector<128x128xf32>
    %34 = arith.truncf %33 : vector<128x128xf32> to vector<128x128xbf16>
    %cst_14 = arith.constant dense<0.000000e+00> : vector<1024x128xf32>
    %35 = tpu.matmul %28, %34, %cst_14 {dimension_numbers = #tpu.dot_dimension_numbers<[1], [0], [0], [1], [0, 0, 1, 1], [], []>} : vector<1024x128xbf16>, vector<128x128xbf16>, vector<1024x128xf32> -> vector<1024x128xf32>
    %cst_15 = arith.constant dense<0xFF800000> : vector<1024xf32>
    %36 = vector.multi_reduction <maximumf>, %35, %cst_15 [1] : vector<1024x128xf32> to vector<1024xf32>
    %37 = vector.shape_cast %36 : vector<1024xf32> to vector<1024x1xf32>
    %c0_16 = arith.constant 0 : index
    %c0_17 = arith.constant 0 : index
    %c0_18 = arith.constant 0 : index
    %c0_19 = arith.constant 0 : index
    %38 = vector.load %arg8[%c0_16, %c0_17, %c0_18, %c0_19] : memref<1x1x1024x1xf32, #tpu.memory_space<vmem>>, vector<1x1x1024x1xf32>
    %39 = vector.shape_cast %38 : vector<1x1x1024x1xf32> to vector<1024x1xf32>
    %40 = vector.shape_cast %37 : vector<1024x1xf32> to vector<1x1x1024x1xf32>
    tpu.vector_store %arg8[%c0_16, %c0_17, %c0_18, %c0_19], %40 {strides = array<i32>} : memref<1x1x1024x1xf32, #tpu.memory_space<vmem>>, vector<1x1x1024x1xf32>,
    return
  }
  func.func @transform_0(%arg0: i32, %arg1: i32) -> (i32, i32, i32) {
    %c0_i32 = arith.constant 0 : i32
    %c0_i32_0 = arith.constant 0 : i32
    return %arg0, %c0_i32, %arg1 : i32, i32, i32
  }
  func.func @transform_1(%arg0: i32, %arg1: i32) -> (i32, i32) {
    %c0_i32 = arith.constant 0 : i32
    %c0_i32_0 = arith.constant 0 : i32
    %c0_i32_1 = arith.constant 0 : i32
    return %c0_i32, %c0_i32_0 : i32, i32
  }
  func.func @transform_2(%arg0: i32, %arg1: i32) -> (i32, i32) {
    %c0_i32 = arith.constant 0 : i32
    %c0_i32_0 = arith.constant 0 : i32
    %c0_i32_1 = arith.constant 0 : i32
    return %c0_i32, %c0_i32_0 : i32, i32
  }
  func.func @transform_3(%arg0: i32, %arg1: i32) -> (i32, i32) {
    %c0_i32 = arith.constant 0 : i32
    %c0_i32_0 = arith.constant 0 : i32
    %c0_i32_1 = arith.constant 0 : i32
    return %c0_i32, %c0_i32_0 : i32, i32
  }
  func.func @transform_4(%arg0: i32, %arg1: i32) -> (i32, i32) {
    %c0_i32 = arith.constant 0 : i32
    %c0_i32_0 = arith.constant 0 : i32
    %c0_i32_1 = arith.constant 0 : i32
    return %c0_i32, %c0_i32_0 : i32, i32
  }
  func.func @transform_5(%arg0: i32, %arg1: i32) -> (i32, i32) {
    %c0_i32 = arith.constant 0 : i32
    %c0_i32_0 = arith.constant 0 : i32
    %c0_i32_1 = arith.constant 0 : i32
    return %c0_i32, %c0_i32_0 : i32, i32
  }
  func.func @transform_6(%arg0: i32, %arg1: i32) -> (i32, i32, i32, i32) {
    %c0_i32 = arith.constant 0 : i32
    %c0_i32_0 = arith.constant 0 : i32
    %c0_i32_1 = arith.constant 0 : i32
    return %arg0, %arg1, %c0_i32, %c0_i32_0 : i32, i32, i32, i32
  }
}

</mosaic_0001>

<llo_original>
// kernel: tpu_custom_call.1
$region0: #{tpu_custom_call.1}
  #allocation0 [shape = 'u32[]', space=smem, size = 0x4, offset = 0x4, fixed_abs, tag = 'smem constant byte address 0x4 - core index']
  #allocation1 [shape = 'u32[144,128]{1,0:T(1,128)}', space=vmem, size = 0x12000, scoped, tag = 'internal scratch']
  %s0 = inlined_call_operand.vmem [shape: f32[2,3,384], index: 0, kind: input, shape index: {}]
  %s1 = inlined_call_operand.vmem [shape: f32[64,3], index: 1, kind: input, shape index: {}]
  %s2 = inlined_call_operand.vmem [shape: f32[64,1], index: 2, kind: input, shape index: {}]
  %s3 = inlined_call_operand.vmem [shape: bf16[128,64], index: 3, kind: input, shape index: {}]
  %s4 = inlined_call_operand.vmem [shape: f32[128,1], index: 4, kind: input, shape index: {}]
  %s5 = inlined_call_operand.hbm [shape: bf16[1024,128], index: 5, kind: input, shape index: {}]
  %s6 = inlined_call_operand.vmem [shape: f32[2,3,1024,1], index: 6, kind: output, shape index: {}]
  %s7 = sld [smem:[#allocation0]]
  $region61: #{tpu_custom_call.1} parent=0
    _
  %s9 = ssub.s32 1, %s7
  %s10 = scalar_select 0, %s9, %s7
  $region1: #{tpu_custom_call.1} parent=0
    #allocation2 [shape = 'u8[262144]{0}', space=vmem, size = 0x40000, scoped, tag = 'input window, operand 5, single buffered']
    #allocation3 [shape = 's32[2]{0}', space=sflag, size = 0x8, scoped, tag = 'scoped memory for tpu_custom_call.1']
    %11 = vsyncpa [#allocation3], 0
    loop: start=0, step=1, limit=8
    $region2: #{tpu_custom_call.1} parent=1 // loop_pre_header
      _
    $region3: #{tpu_custom_call.1} parent=1 // loop_header
      %s13 = sphi 0, %s17
      %p14 = scmp.ge.s32.totalorder %s13, 8
      %s20 = sphi 0, %s32
      %s21 = sphi 0, %s28
      %s22 = sphi 0, %s20
      %s23 = sphi 0, %s21
      %s24 = sphi 0, %s22
      %s25 = sphi 0, %s23
      %s37 = sphi 0, %s39
      %s40 = sphi 0, %s37
      %s41 = sphi 0, %s40
      %s57 = sphi 0, %s41
      %s61 = sphi 0, %s61
      %s63 = sphi 0, %s61
      %s64 = sphi 0, %s63
      %s78 = sphi 0, %s64
      %s82 = sphi 0, %s82
      %s84 = sphi 0, %s82
      %s85 = sphi 0, %s84
      %s99 = sphi 0, %s85
      %s103 = sphi 0, %s103
      %s105 = sphi 0, %s103
      %s106 = sphi 0, %s105
      %s120 = sphi 0, %s106
      %s124 = sphi 0, %s124
      %s126 = sphi 0, %s124
      %s127 = sphi 0, %s126
      %s141 = sphi 0, %s127
      %s145 = sphi 0, %s145
      %s147 = sphi 0, %s145
      %s148 = sphi 0, %s147
      %s162 = sphi 0, %s148
      %s170 = sphi 0, %s172
      %s173 = sphi 0, %s170
      %s174 = sphi 0, %s173
      %s190 = sphi 0, %s174
    $region4: #{tpu_custom_call.1} parent=1 // loop_header_branch
      %16 = sbr.rel (%p14) target = $region8
    $region5: #{tpu_custom_call.1} parent=1 // loop_body
      %s18 = ssub.s32 %s13, 1
      %s19 = ssub.s32 %s13, 2
      %s26 = sadd.s32 1, %s21
      %p27 = scmp.ge.s32.totalorder %s26, 3
      %s28 = scalar_select %p27, 0, %s26
      %s29 = sadd.s32 1, %s20
      %s30 = scalar_select %p27, %s29, %s20
      %p31 = scmp.ge.s32.totalorder %s30, 2
      %s32 = scalar_select %p31, 0, %s30
      %s33 = ssub.s32 %s20, %s32
      %s34 = ssub.s32 %s21, %s28
      %s35 = sor.u32 %s33, %s34
      %p36 = scmp.eq.s32.totalorder %s35, 0
      %s38 = sadd.s32 %s37, 1
      %s39 = scalar_select %p36, %s37, %s38
      %p42 = pneg %p36
      %p43 = scmp.eq.s32.totalorder %s13, 5
      %p44 = por %p42, %p43
      %p45 = scmp.ne.s32.totalorder %s37, %s40
      %p46 = scmp.eq.s32.totalorder %s13, 0
      %p47 = por %p45, %p46
      %p48 = scmp.ne.s32.totalorder %s37, %s40
      %p49 = scmp.eq.s32.totalorder %s18, 5
      %p50 = por %p48, %p49
      %p51 = scmp.ne.s32.totalorder %s40, %s41
      %p52 = scmp.eq.s32.totalorder %s18, 0
      %p53 = por %p51, %p52
      %p54 = scmp.ne.s32.totalorder %s40, %s41
      %p55 = scmp.eq.s32.totalorder %s19, 5
      %p56 = por %p54, %p55
      %p58 = scmp.ne.s32.totalorder %s41, %s57
      %p59 = scmp.eq.s32.totalorder %s19, 0
      %p60 = por %p58, %p59
      %s62 = sadd.s32 %s61, 1
      %p65 = scmp.eq.s32.totalorder %s13, 5
      %p66 = scmp.ne.s32.totalorder %s61, %s63
      %p67 = scmp.eq.s32.totalorder %s13, 0
      %p68 = por %p66, %p67
      %p69 = scmp.ne.s32.totalorder %s61, %s63
      %p70 = scmp.eq.s32.totalorder %s18, 5
      %p71 = por %p69, %p70
      %p72 = scmp.ne.s32.totalorder %s63, %s64
      %p73 = scmp.eq.s32.totalorder %s18, 0
      %p74 = por %p72, %p73
      %p75 = scmp.ne.s32.totalorder %s63, %s64
      %p76 = scmp.eq.s32.totalorder %s19, 5
      %p77 = por %p75, %p76
      %p79 = scmp.ne.s32.totalorder %s64, %s78
      %p80 = scmp.eq.s32.totalorder %s19, 0
      %p81 = por %p79, %p80
      %s83 = sadd.s32 %s82, 1
      %p86 = scmp.eq.s32.totalorder %s13, 5
      %p87 = scmp.ne.s32.totalorder %s82, %s84
      %p88 = scmp.eq.s32.totalorder %s13, 0
      %p89 = por %p87, %p88
      %p90 = scmp.ne.s32.totalorder %s82, %s84
      %p91 = scmp.eq.s32.totalorder %s18, 5
      %p92 = por %p90, %p91
      %p93 = scmp.ne.s32.totalorder %s84, %s85
      %p94 = scmp.eq.s32.totalorder %s18, 0
      %p95 = por %p93, %p94
      %p96 = scmp.ne.s32.totalorder %s84, %s85
      %p97 = scmp.eq.s32.totalorder %s19, 5
      %p98 = por %p96, %p97
      %p100 = scmp.ne.s32.totalorder %s85, %s99
      %p101 = scmp.eq.s32.totalorder %s19, 0
      %p102 = por %p100, %p101
      %s104 = sadd.s32 %s103, 1
      %p107 = scmp.eq.s32.totalorder %s13, 5
      %p108 = scmp.ne.s32.totalorder %s103, %s105
      %p109 = scmp.eq.s32.totalorder %s13, 0
      %p110 = por %p108, %p109
      %p111 = scmp.ne.s32.totalorder %s103, %s105
      %p112 = scmp.eq.s32.totalorder %s18, 5
      %p113 = por %p111, %p112
      %p114 = scmp.ne.s32.totalorder %s105, %s106
      %p115 = scmp.eq.s32.totalorder %s18, 0
      %p116 = por %p114, %p115
      %p117 = scmp.ne.s32.totalorder %s105, %s106
      %p118 = scmp.eq.s32.totalorder %s19, 5
      %p119 = por %p117, %p118
      %p121 = scmp.ne.s32.totalorder %s106, %s120
      %p122 = scmp.eq.s32.totalorder %s19, 0
      %p123 = por %p121, %p122
      %s125 = sadd.s32 %s124, 1
      %p128 = scmp.eq.s32.totalorder %s13, 5
      %p129 = scmp.ne.s32.totalorder %s124, %s126
      %p130 = scmp.eq.s32.totalorder %s13, 0
      %p131 = por %p129, %p130
      %p132 = scmp.ne.s32.totalorder %s124, %s126
      %p133 = scmp.eq.s32.totalorder %s18, 5
      %p134 = por %p132, %p133
      %p135 = scmp.ne.s32.totalorder %s126, %s127
      %p136 = scmp.eq.s32.totalorder %s18, 0
      %p137 = por %p135, %p136
      %p138 = scmp.ne.s32.totalorder %s126, %s127
      %p139 = scmp.eq.s32.totalorder %s19, 5
      %p140 = por %p138, %p139
      %p142 = scmp.ne.s32.totalorder %s127, %s141
      %p143 = scmp.eq.s32.totalorder %s19, 0
      %p144 = por %p142, %p143
      %s146 = sadd.s32 %s145, 1
      %p149 = scmp.eq.s32.totalorder %s13, 5
      %p150 = scmp.ne.s32.totalorder %s145, %s147
      %p151 = scmp.eq.s32.totalorder %s13, 0
      %p152 = por %p150, %p151
      %p153 = scmp.ne.s32.totalorder %s145, %s147
      %p154 = scmp.eq.s32.totalorder %s18, 5
      %p155 = por %p153, %p154
      %p156 = scmp.ne.s32.totalorder %s147, %s148
      %p157 = scmp.eq.s32.totalorder %s18, 0
      %p158 = por %p156, %p157
      %p159 = scmp.ne.s32.totalorder %s147, %s148
      %p160 = scmp.eq.s32.totalorder %s19, 5
      %p161 = por %p159, %p160
      %p163 = scmp.ne.s32.totalorder %s148, %s162
      %p164 = scmp.eq.s32.totalorder %s19, 0
      %p165 = por %p163, %p164
      %s166 = ssub.s32 %s20, %s32
      %s167 = ssub.s32 %s21, %s28
      %s168 = sor.u32 %s166, %s167
      %p169 = scmp.eq.s32.totalorder %s168, 0
      %s171 = sadd.s32 %s170, 1
      %s172 = scalar_select %p169, %s170, %s171
      %p175 = pneg %p169
      %p176 = scmp.eq.s32.totalorder %s13, 5
      %p177 = por %p175, %p176
      %p178 = scmp.ne.s32.totalorder %s170, %s173
      %p179 = scmp.eq.s32.totalorder %s13, 0
      %p180 = por %p178, %p179
      %p181 = scmp.ne.s32.totalorder %s170, %s173
      %p182 = scmp.eq.s32.totalorder %s18, 5
      %p183 = por %p181, %p182
      %p184 = scmp.ne.s32.totalorder %s173, %s174
      %p185 = scmp.eq.s32.totalorder %s18, 0
      %p186 = por %p184, %p185
      %p187 = scmp.ne.s32.totalorder %s173, %s174
      %p188 = scmp.eq.s32.totalorder %s19, 5
      %p189 = por %p187, %p188
      %p191 = scmp.ne.s32.totalorder %s174, %s190
      %p192 = scmp.eq.s32.totalorder %s19, 0
      %p193 = por %p191, %p192
      %p194 = scmp.le.s32.totalorder 1, %s13
      %p195 = scmp.lt.s32.totalorder %s13, 7
      %p196 = pnand %p194, %p195
      %p197 = pneg %p196
      // Predicated region
      $region9: #{tpu_custom_call.1} parent=5 // pred_check
        _
      $region10: #{tpu_custom_call.1} parent=5 // pred_check_branch
        %199 = sbr.rel (%p196) target = $region12
      $region11: #{tpu_custom_call.1} parent=5 // pred_region
        %s200 = ssub.s32 %s13, 1
        // Predicated region
        $region13: #{tpu_custom_call.1} parent=11 // pred_check
          %p201 = pneg %p74
        $region14: #{tpu_custom_call.1} parent=11 // pred_check_branch
          %203 = sbr.rel (%p201) target = $region16
        $region15: #{tpu_custom_call.1} parent=11 // pred_region
          _
        $region16: #{tpu_custom_call.1} parent=11 // pred_fallthru
          _
        // Predicated region
        $region17: #{tpu_custom_call.1} parent=11 // pred_check
          %p204 = pneg %p95
        $region18: #{tpu_custom_call.1} parent=11 // pred_check_branch
          %206 = sbr.rel (%p204) target = $region20
        $region19: #{tpu_custom_call.1} parent=11 // pred_region
          _
        $region20: #{tpu_custom_call.1} parent=11 // pred_fallthru
          _
        // Predicated region
        $region21: #{tpu_custom_call.1} parent=11 // pred_check
          %p207 = pneg %p116
        $region22: #{tpu_custom_call.1} parent=11 // pred_check_branch
          %209 = sbr.rel (%p207) target = $region24
        $region23: #{tpu_custom_call.1} parent=11 // pred_region
          _
        $region24: #{tpu_custom_call.1} parent=11 // pred_fallthru
          _
        // Predicated region
        $region25: #{tpu_custom_call.1} parent=11 // pred_check
          %p210 = pneg %p137
        $region26: #{tpu_custom_call.1} parent=11 // pred_check_branch
          %212 = sbr.rel (%p210) target = $region28
        $region27: #{tpu_custom_call.1} parent=11 // pred_region
          _
        $region28: #{tpu_custom_call.1} parent=11 // pred_fallthru
          _
        // Predicated region
        $region29: #{tpu_custom_call.1} parent=11 // pred_check
          %p213 = pneg %p158
        $region30: #{tpu_custom_call.1} parent=11 // pred_check_branch
          %215 = sbr.rel (%p213) target = $region32
        $region31: #{tpu_custom_call.1} parent=11 // pred_region
          %s217 = ssub.s32 8192, 8192
          %218 = vsyncadd [#allocation3], %s217
          %s219 = sshll.u32 [#allocation2], 4
          %s220 = int_to_ptr.vmem [resolvable:$true] %s219
          %225 = dma.hbm_to_vmem [thread:$0]  %s5, 8192, %s220, [#allocation3], 64, 64, 4
        $region32: #{tpu_custom_call.1} parent=11 // pred_fallthru
          _
      $region12: #{tpu_custom_call.1} parent=5 // pred_fallthru
        _
      %p226 = scmp.lt.s32.totalorder %s13, 6
      // Predicated region
      $region33: #{tpu_custom_call.1} parent=5 // pred_check
        %p227 = pneg %p226
      $region34: #{tpu_custom_call.1} parent=5 // pred_check_branch
        %229 = sbr.rel (%p227) target = $region36
      $region35: #{tpu_custom_call.1} parent=5 // pred_region
        // Predicated region
        $region37: #{tpu_custom_call.1} parent=35 // pred_check
          %p230 = pneg %p47
        $region38: #{tpu_custom_call.1} parent=35 // pred_check_branch
          %232 = sbr.rel (%p230) target = $region40
        $region39: #{tpu_custom_call.1} parent=35 // pred_region
          %p233 = scmp.lt.s32.totalorder %s20, 1
          %s234 = scalar_select %p233, %s20, 1
          %p235 = scmp.lt.s32.totalorder %s21, 2
          %s236 = scalar_select %p235, %s21, 2
          %s237 = smul.addr %s234, 3
          %s238 = sadd.s32 %s236, %s237
          %s239 = smul.addr %s238, 4
          %s240 = scalar_lea.vmem %s0, %s239
        $region40: #{tpu_custom_call.1} parent=35 // pred_fallthru
          _
      $region36: #{tpu_custom_call.1} parent=5 // pred_fallthru
        _
      %p241 = scmp.le.s32.totalorder 1, %s13
      %p242 = scmp.lt.s32.totalorder %s13, 7
      %p243 = pnand %p241, %p242
      %p244 = pneg %p243
      // Predicated region
      $region41: #{tpu_custom_call.1} parent=5 // pred_check
        _
      $region42: #{tpu_custom_call.1} parent=5 // pred_check_branch
        %246 = sbr.rel (%p243) target = $region44
      $region43: #{tpu_custom_call.1} parent=5 // pred_region
        %s247 = ssub.s32 %s13, 1
        // Predicated region
        $region45: #{tpu_custom_call.1} parent=43 // pred_check
          %p248 = pneg %p158
        $region46: #{tpu_custom_call.1} parent=43 // pred_check_branch
          %250 = sbr.rel (%p248) target = $region48
        $region47: #{tpu_custom_call.1} parent=43 // pred_region
          %251 = dma.done [#allocation3], 8192
        $region48: #{tpu_custom_call.1} parent=43 // pred_fallthru
          _
        %p252 = scmp.lt.s32.totalorder %s22, 1
        %s253 = scalar_select %p252, %s22, 1
        %p254 = scmp.lt.s32.totalorder %s23, 2
        %s255 = scalar_select %p254, %s23, 2
        %s256 = smul.addr %s253, 3
        %s257 = sadd.s32 %s255, %s256
        %s258 = smul.addr %s257, 4
        %s259 = scalar_lea.vmem %s0, %s258
        %p260 = pneg %p53
        %p261 = pneg %p50
        %p262 = pneg %p74
        %p263 = pneg %p71
        %p264 = pneg %p95
        %p265 = pneg %p92
        %p266 = pneg %p116
        %p267 = pneg %p113
        %p268 = pneg %p137
        %p269 = pneg %p134
        %p270 = pneg %p158
        %p271 = pneg %p155
        %p272 = pneg %p186
        %p273 = pneg %p183
        %p274 = scmp.lt.s32.totalorder %s22, 1
        %s275 = scalar_select %p274, %s22, 1
        %p276 = scmp.lt.s32.totalorder %s23, 2
        %s277 = scalar_select %p276, %s23, 2
        %s278 = smul.addr %s277, 128
        %s279 = smul.addr %s275, 384
        %s280 = sadd.s32 %s278, %s279
        %s281 = smul.addr %s280, 8
        %s282 = scalar_lea.vmem %s6, %s281
        %p283 = scmp.lt.s32.totalorder %s22, 1
        %s284 = scalar_select %p283, %s22, 1
        %p285 = scmp.lt.s32.totalorder %s23, 2
        %s286 = scalar_select %p285, %s23, 2
        %s287 = smul.addr %s284, 3
        %s288 = sadd.s32 %s286, %s287
        %s289 = smul.addr %s288, 4
        %s290 = scalar_lea.vmem %s0, %s289
        %p291 = scmp.lt.s32.totalorder %s22, 1
        %s292 = scalar_select %p291, %s22, 1
        %p293 = scmp.lt.s32.totalorder %s23, 2
        %s294 = scalar_select %p293, %s23, 2
        %s295 = smul.addr %s294, 128
        %s296 = smul.addr %s292, 384
        %s297 = sadd.s32 %s295, %s296
        %s298 = smul.addr %s297, 8
        %s299 = scalar_lea.vmem %s6, %s298
        %v301 = vld [vmem:[%s290] sm:$0x7]
        %v302 = vld [vmem:[%s1] sm:$0xff]
        %v303 = vld [vmem:[%s1 + $0x8] sm:$0xff]
        %v304 = vld [vmem:[%s1 + $0x10] sm:$0xff]
        %v305 = vld [vmem:[%s1 + $0x18] sm:$0xff]
        %v306 = vld [vmem:[%s1 + $0x20] sm:$0xff]
        %v307 = vld [vmem:[%s1 + $0x28] sm:$0xff]
        %v308 = vld [vmem:[%s1 + $0x30] sm:$0xff]
        %v309 = vld [vmem:[%s1 + $0x38] sm:$0xff]
        %311 = vset.pattern.permute.xlu0 0
        %312 = vperm.xlu0 %311, %v302
        %v313 = vpop.permute.xlu0 %312
        %316 = vset.pattern.permute.xlu0 0
        %317 = vperm.xlu0 %316, %v303
        %v318 = vpop.permute.xlu0 %317
        %321 = vset.pattern.permute.xlu0 0
        %322 = vperm.xlu0 %321, %v304
        %v323 = vpop.permute.xlu0 %322
        %326 = vset.pattern.permute.xlu0 0
        %327 = vperm.xlu0 %326, %v305
        %v328 = vpop.permute.xlu0 %327
        %331 = vset.pattern.permute.xlu0 0
        %332 = vperm.xlu0 %331, %v306
        %v333 = vpop.permute.xlu0 %332
        %336 = vset.pattern.permute.xlu0 0
        %337 = vperm.xlu0 %336, %v307
        %v338 = vpop.permute.xlu0 %337
        %341 = vset.pattern.permute.xlu0 0
        %342 = vperm.xlu0 %341, %v308
        %v343 = vpop.permute.xlu0 %342
        %346 = vset.pattern.permute.xlu0 0
        %347 = vperm.xlu0 %346, %v309
        %v348 = vpop.permute.xlu0 %347
        %v350 = vlaneseq
        %v351 = vshrl.u32 %v350, 7
        %v352 = vsub.s32 0, %v351
        %v353 = vrot.slane %v301, %v352
        %v354 = vmul.f32 %v313, %v353
        %v355 = vmul.f32 %v318, %v353
        %v356 = vmul.f32 %v323, %v353
        %v357 = vmul.f32 %v328, %v353
        %v358 = vmul.f32 %v333, %v353
        %v359 = vmul.f32 %v338, %v353
        %v360 = vmul.f32 %v343, %v353
        %v361 = vmul.f32 %v348, %v353
        %362 = vset.pattern.permute.xlu0 1
        %363 = vperm.xlu0 %362, %v302
        %v364 = vpop.permute.xlu0 %363
        %366 = vset.pattern.permute.xlu0 1
        %367 = vperm.xlu0 %366, %v303
        %v368 = vpop.permute.xlu0 %367
        %370 = vset.pattern.permute.xlu0 1
        %371 = vperm.xlu0 %370, %v304
        %v372 = vpop.permute.xlu0 %371
        %374 = vset.pattern.permute.xlu0 1
        %375 = vperm.xlu0 %374, %v305
        %v376 = vpop.permute.xlu0 %375
        %378 = vset.pattern.permute.xlu0 1
        %379 = vperm.xlu0 %378, %v306
        %v380 = vpop.permute.xlu0 %379
        %382 = vset.pattern.permute.xlu0 1
        %383 = vperm.xlu0 %382, %v307
        %v384 = vpop.permute.xlu0 %383
        %386 = vset.pattern.permute.xlu0 1
        %387 = vperm.xlu0 %386, %v308
        %v388 = vpop.permute.xlu0 %387
        %390 = vset.pattern.permute.xlu0 1
        %391 = vperm.xlu0 %390, %v309
        %v392 = vpop.permute.xlu0 %391
        %v394 = vlaneseq
        %v395 = vshrl.u32 %v394, 7
        %v396 = vsub.s32 1, %v395
        %v397 = vrot.slane %v301, %v396
        %v398 = vmul.f32 %v364, %v397
        %v399 = vmul.f32 %v368, %v397
        %v400 = vmul.f32 %v372, %v397
        %v401 = vmul.f32 %v376, %v397
        %v402 = vmul.f32 %v380, %v397
        %v403 = vmul.f32 %v384, %v397
        %v404 = vmul.f32 %v388, %v397
        %v405 = vmul.f32 %v392, %v397
        %v406 = vadd.f32 %v354, %v398
        %v407 = vadd.f32 %v355, %v399
        %v408 = vadd.f32 %v356, %v400
        %v409 = vadd.f32 %v357, %v401
        %v410 = vadd.f32 %v358, %v402
        %v411 = vadd.f32 %v359, %v403
        %v412 = vadd.f32 %v360, %v404
        %v413 = vadd.f32 %v361, %v405
        %414 = vset.pattern.permute.xlu0 2
        %415 = vperm.xlu0 %414, %v302
        %v416 = vpop.permute.xlu0 %415
        %418 = vset.pattern.permute.xlu0 2
        %419 = vperm.xlu0 %418, %v303
        %v420 = vpop.permute.xlu0 %419
        %422 = vset.pattern.permute.xlu0 2
        %423 = vperm.xlu0 %422, %v304
        %v424 = vpop.permute.xlu0 %423
        %426 = vset.pattern.permute.xlu0 2
        %427 = vperm.xlu0 %426, %v305
        %v428 = vpop.permute.xlu0 %427
        %430 = vset.pattern.permute.xlu0 2
        %431 = vperm.xlu0 %430, %v306
        %v432 = vpop.permute.xlu0 %431
        %434 = vset.pattern.permute.xlu0 2
        %435 = vperm.xlu0 %434, %v307
        %v436 = vpop.permute.xlu0 %435
        %438 = vset.pattern.permute.xlu0 2
        %439 = vperm.xlu0 %438, %v308
        %v440 = vpop.permute.xlu0 %439
        %442 = vset.pattern.permute.xlu0 2
        %443 = vperm.xlu0 %442, %v309
        %v444 = vpop.permute.xlu0 %443
        %v446 = vlaneseq
        %v447 = vshrl.u32 %v446, 7
        %v448 = vsub.s32 2, %v447
        %v449 = vrot.slane %v301, %v448
        %v450 = vmul.f32 %v416, %v449
        %v451 = vmul.f32 %v420, %v449
        %v452 = vmul.f32 %v424, %v449
        %v453 = vmul.f32 %v428, %v449
        %v454 = vmul.f32 %v432, %v449
        %v455 = vmul.f32 %v436, %v449
        %v456 = vmul.f32 %v440, %v449
        %v457 = vmul.f32 %v444, %v449
        %v458 = vadd.f32 %v406, %v450
        %v459 = vadd.f32 %v407, %v451
        %v460 = vadd.f32 %v408, %v452
        %v461 = vadd.f32 %v409, %v453
        %v462 = vadd.f32 %v410, %v454
        %v463 = vadd.f32 %v411, %v455
        %v464 = vadd.f32 %v412, %v456
        %v465 = vadd.f32 %v413, %v457
        %v466 = vld [vmem:[%s2] sm:$0xff]
        %v467 = vld [vmem:[%s2 + $0x8] sm:$0xff]
        %v468 = vld [vmem:[%s2 + $0x10] sm:$0xff]
        %v469 = vld [vmem:[%s2 + $0x18] sm:$0xff]
        %v470 = vld [vmem:[%s2 + $0x20] sm:$0xff]
        %v471 = vld [vmem:[%s2 + $0x28] sm:$0xff]
        %v472 = vld [vmem:[%s2 + $0x30] sm:$0xff]
        %v473 = vld [vmem:[%s2 + $0x38] sm:$0xff]
        %475 = vset.pattern.permute.xlu0 0
        %476 = vperm.xlu0 %475, %v466
        %v477 = vpop.permute.xlu0 %476
        %480 = vset.pattern.permute.xlu0 0
        %481 = vperm.xlu0 %480, %v467
        %v482 = vpop.permute.xlu0 %481
        %485 = vset.pattern.permute.xlu0 0
        %486 = vperm.xlu0 %485, %v468
        %v487 = vpop.permute.xlu0 %486
        %490 = vset.pattern.permute.xlu0 0
        %491 = vperm.xlu0 %490, %v469
        %v492 = vpop.permute.xlu0 %491
        %495 = vset.pattern.permute.xlu0 0
        %496 = vperm.xlu0 %495, %v470
        %v497 = vpop.permute.xlu0 %496
        %500 = vset.pattern.permute.xlu0 0
        %501 = vperm.xlu0 %500, %v471
        %v502 = vpop.permute.xlu0 %501
        %505 = vset.pattern.permute.xlu0 0
        %506 = vperm.xlu0 %505, %v472
        %v507 = vpop.permute.xlu0 %506
        %510 = vset.pattern.permute.xlu0 0
        %511 = vperm.xlu0 %510, %v473
        %v512 = vpop.permute.xlu0 %511
        %v514 = vadd.f32 %v458, %v477
        %v515 = vadd.f32 %v459, %v482
        %v516 = vadd.f32 %v460, %v487
        %v517 = vadd.f32 %v461, %v492
        %v518 = vadd.f32 %v462, %v497
        %v519 = vadd.f32 %v463, %v502
        %v520 = vadd.f32 %v464, %v507
        %v521 = vadd.f32 %v465, %v512
        %v522 = vmax.f32 %v514, 0.0
        %v523 = vmax.f32 %v515, 0.0
        %v524 = vmax.f32 %v516, 0.0
        %v525 = vmax.f32 %v517, 0.0
        %v526 = vmax.f32 %v518, 0.0
        %v527 = vmax.f32 %v519, 0.0
        %v528 = vmax.f32 %v520, 0.0
        %v529 = vmax.f32 %v521, 0.0
        %v530 = vpack.c.bf16 %v523, %v522
        %v531 = vpack.c.bf16 %v525, %v524
        %v532 = vpack.c.bf16 %v527, %v526
        %v533 = vpack.c.bf16 %v529, %v528
        %v534 = vld [vmem:[%s3] sm:$0xf]
        %v535 = vld [vmem:[%s3 + $0x4] sm:$0xf]
        %v536 = vld [vmem:[%s3 + $0x8] sm:$0xf]
        %v537 = vld [vmem:[%s3 + $0xc] sm:$0xf]
        %v538 = vld [vmem:[%s3 + $0x10] sm:$0xf]
        %v539 = vld [vmem:[%s3 + $0x14] sm:$0xf]
        %v540 = vld [vmem:[%s3 + $0x18] sm:$0xf]
        %v541 = vld [vmem:[%s3 + $0x1c] sm:$0xf]
        %v542 = vld [vmem:[%s3 + $0x20] sm:$0xf]
        %v543 = vld [vmem:[%s3 + $0x24] sm:$0xf]
        %v544 = vld [vmem:[%s3 + $0x28] sm:$0xf]
        %v545 = vld [vmem:[%s3 + $0x2c] sm:$0xf]
        %v546 = vld [vmem:[%s3 + $0x30] sm:$0xf]
        %v547 = vld [vmem:[%s3 + $0x34] sm:$0xf]
        %v548 = vld [vmem:[%s3 + $0x38] sm:$0xf]
        %v549 = vld [vmem:[%s3 + $0x3c] sm:$0xf]
        %v550 = vld [vmem:[%s4] sm:$0xff]
        %v551 = vld [vmem:[%s4 + $0x8] sm:$0xff]
        %v552 = vld [vmem:[%s4 + $0x10] sm:$0xff]
        %v553 = vld [vmem:[%s4 + $0x18] sm:$0xff]
        %v554 = vld [vmem:[%s4 + $0x20] sm:$0xff]
        %v555 = vld [vmem:[%s4 + $0x28] sm:$0xff]
        %v556 = vld [vmem:[%s4 + $0x30] sm:$0xff]
        %v557 = vld [vmem:[%s4 + $0x38] sm:$0xff]
        %v558 = vld [vmem:[%s4 + $0x40] sm:$0xff]
        %v559 = vld [vmem:[%s4 + $0x48] sm:$0xff]
        %v560 = vld [vmem:[%s4 + $0x50] sm:$0xff]
        %v561 = vld [vmem:[%s4 + $0x58] sm:$0xff]
        %v562 = vld [vmem:[%s4 + $0x60] sm:$0xff]
        %v563 = vld [vmem:[%s4 + $0x68] sm:$0xff]
        %v564 = vld [vmem:[%s4 + $0x70] sm:$0xff]
        %v565 = vld [vmem:[%s4 + $0x78] sm:$0xff]
        %v566 = vld [vmem:[#allocation2] sm:$0xf]
        %v567 = vld [vmem:[#allocation2 + $0x4] sm:$0xf]
        %v568 = vld [vmem:[#allocation2 + $0x8] sm:$0xf]
        %v569 = vld [vmem:[#allocation2 + $0xc] sm:$0xf]
        %v570 = vld [vmem:[#allocation2 + $0x10] sm:$0xf]
        %v571 = vld [vmem:[#allocation2 + $0x14] sm:$0xf]
        %v572 = vld [vmem:[#allocation2 + $0x18] sm:$0xf]
        %v573 = vld [vmem:[#allocation2 + $0x1c] sm:$0xf]
        %v574 = vld [vmem:[#allocation2 + $0x20] sm:$0xf]
        %v575 = vld [vmem:[#allocation2 + $0x24] sm:$0xf]
        %v576 = vld [vmem:[#allocation2 + $0x28] sm:$0xf]
        %v577 = vld [vmem:[#allocation2 + $0x2c] sm:$0xf]
        %v578 = vld [vmem:[#allocation2 + $0x30] sm:$0xf]
        %v579 = vld [vmem:[#allocation2 + $0x34] sm:$0xf]
        %v580 = vld [vmem:[#allocation2 + $0x38] sm:$0xf]
        %v581 = vld [vmem:[#allocation2 + $0x3c] sm:$0xf]
        %v582 = vld [vmem:[#allocation2 + $0x40] sm:$0xf]
        %v583 = vld [vmem:[#allocation2 + $0x44] sm:$0xf]
        %v584 = vld [vmem:[#allocation2 + $0x48] sm:$0xf]
        %v585 = vld [vmem:[#allocation2 + $0x4c] sm:$0xf]
        %v586 = vld [vmem:[#allocation2 + $0x50] sm:$0xf]
        %v587 = vld [vmem:[#allocation2 + $0x54] sm:$0xf]
        %v588 = vld [vmem:[#allocation2 + $0x58] sm:$0xf]
        %v589 = vld [vmem:[#allocation2 + $0x5c] sm:$0xf]
        %v590 = vld [vmem:[#allocation2 + $0x60] sm:$0xf]
        %v591 = vld [vmem:[#allocation2 + $0x64] sm:$0xf]
        %v592 = vld [vmem:[#allocation2 + $0x68] sm:$0xf]
        %v593 = vld [vmem:[#allocation2 + $0x6c] sm:$0xf]
        %v594 = vld [vmem:[#allocation2 + $0x70] sm:$0xf]
        %v595 = vld [vmem:[#allocation2 + $0x74] sm:$0xf]
        %v596 = vld [vmem:[#allocation2 + $0x78] sm:$0xf]
        %v597 = vld [vmem:[#allocation2 + $0x7c] sm:$0xf]
        %v598 = vld [vmem:[#allocation2 + $0x80] sm:$0xf]
        %v599 = vld [vmem:[#allocation2 + $0x84] sm:$0xf]
        %v600 = vld [vmem:[#allocation2 + $0x88] sm:$0xf]
        %v601 = vld [vmem:[#allocation2 + $0x8c] sm:$0xf]
        %v602 = vld [vmem:[#allocation2 + $0x90] sm:$0xf]
        %v603 = vld [vmem:[#allocation2 + $0x94] sm:$0xf]
        %v604 = vld [vmem:[#allocation2 + $0x98] sm:$0xf]
        %v605 = vld [vmem:[#allocation2 + $0x9c] sm:$0xf]
        %v606 = vld [vmem:[#allocation2 + $0xa0] sm:$0xf]
        %v607 = vld [vmem:[#allocation2 + $0xa4] sm:$0xf]
        %v608 = vld [vmem:[#allocation2 + $0xa8] sm:$0xf]
        %v609 = vld [vmem:[#allocation2 + $0xac] sm:$0xf]
        %v610 = vld [vmem:[#allocation2 + $0xb0] sm:$0xf]
        %v611 = vld [vmem:[#allocation2 + $0xb4] sm:$0xf]
        %v612 = vld [vmem:[#allocation2 + $0xb8] sm:$0xf]
        %v613 = vld [vmem:[#allocation2 + $0xbc] sm:$0xf]
        %v614 = vld [vmem:[#allocation2 + $0xc0] sm:$0xf]
        %v615 = vld [vmem:[#allocation2 + $0xc4] sm:$0xf]
        %v616 = vld [vmem:[#allocation2 + $0xc8] sm:$0xf]
        %v617 = vld [vmem:[#allocation2 + $0xcc] sm:$0xf]
        %v618 = vld [vmem:[#allocation2 + $0xd0] sm:$0xf]
        %v619 = vld [vmem:[#allocation2 + $0xd4] sm:$0xf]
        %v620 = vld [vmem:[#allocation2 + $0xd8] sm:$0xf]
        %v621 = vld [vmem:[#allocation2 + $0xdc] sm:$0xf]
        %v622 = vld [vmem:[#allocation2 + $0xe0] sm:$0xf]
        %v623 = vld [vmem:[#allocation2 + $0xe4] sm:$0xf]
        %v624 = vld [vmem:[#allocation2 + $0xe8] sm:$0xf]
        %v625 = vld [vmem:[#allocation2 + $0xec] sm:$0xf]
        %v626 = vld [vmem:[#allocation2 + $0xf0] sm:$0xf]
        %v627 = vld [vmem:[#allocation2 + $0xf4] sm:$0xf]
        %v628 = vld [vmem:[#allocation2 + $0xf8] sm:$0xf]
        %v629 = vld [vmem:[#allocation2 + $0xfc] sm:$0xf]
        %v630 = vld [vmem:[#allocation2 + $0x100] sm:$0xf]
        %v631 = vld [vmem:[#allocation2 + $0x104] sm:$0xf]
        %v632 = vld [vmem:[#allocation2 + $0x108] sm:$0xf]
        %v633 = vld [vmem:[#allocation2 + $0x10c] sm:$0xf]
        %v634 = vld [vmem:[#allocation2 + $0x110] sm:$0xf]
        %v635 = vld [vmem:[#allocation2 + $0x114] sm:$0xf]
        %v636 = vld [vmem:[#allocation2 + $0x118] sm:$0xf]
        %v637 = vld [vmem:[#allocation2 + $0x11c] sm:$0xf]
        %v638 = vld [vmem:[#allocation2 + $0x120] sm:$0xf]
        %v639 = vld [vmem:[#allocation2 + $0x124] sm:$0xf]
        %v640 = vld [vmem:[#allocation2 + $0x128] sm:$0xf]
        %v641 = vld [vmem:[#allocation2 + $0x12c] sm:$0xf]
        %v642 = vld [vmem:[#allocation2 + $0x130] sm:$0xf]
        %v643 = vld [vmem:[#allocation2 + $0x134] sm:$0xf]
        %v644 = vld [vmem:[#allocation2 + $0x138] sm:$0xf]
        %v645 = vld [vmem:[#allocation2 + $0x13c] sm:$0xf]
        %v646 = vld [vmem:[#allocation2 + $0x140] sm:$0xf]
        %v647 = vld [vmem:[#allocation2 + $0x144] sm:$0xf]
        %v648 = vld [vmem:[#allocation2 + $0x148] sm:$0xf]
        %v649 = vld [vmem:[#allocation2 + $0x14c] sm:$0xf]
        %v650 = vld [vmem:[#allocation2 + $0x150] sm:$0xf]
        %v651 = vld [vmem:[#allocation2 + $0x154] sm:$0xf]
        %v652 = vld [vmem:[#allocation2 + $0x158] sm:$0xf]
        %v653 = vld [vmem:[#allocation2 + $0x15c] sm:$0xf]
        %v654 = vld [vmem:[#allocation2 + $0x160] sm:$0xf]
        %v655 = vld [vmem:[#allocation2 + $0x164] sm:$0xf]
        %v656 = vld [vmem:[#allocation2 + $0x168] sm:$0xf]
        %v657 = vld [vmem:[#allocation2 + $0x16c] sm:$0xf]
        %v658 = vld [vmem:[#allocation2 + $0x170] sm:$0xf]
        %v659 = vld [vmem:[#allocation2 + $0x174] sm:$0xf]
        %v660 = vld [vmem:[#allocation2 + $0x178] sm:$0xf]
        %v661 = vld [vmem:[#allocation2 + $0x17c] sm:$0xf]
        %v662 = vld [vmem:[#allocation2 + $0x180] sm:$0xf]
        %v663 = vld [vmem:[#allocation2 + $0x184] sm:$0xf]
        %v664 = vld [vmem:[#allocation2 + $0x188] sm:$0xf]
        %v665 = vld [vmem:[#allocation2 + $0x18c] sm:$0xf]
        %v666 = vld [vmem:[#allocation2 + $0x190] sm:$0xf]
        %v667 = vld [vmem:[#allocation2 + $0x194] sm:$0xf]
        %v668 = vld [vmem:[#allocation2 + $0x198] sm:$0xf]
        %v669 = vld [vmem:[#allocation2 + $0x19c] sm:$0xf]
        %v670 = vld [vmem:[#allocation2 + $0x1a0] sm:$0xf]
        %v671 = vld [vmem:[#allocation2 + $0x1a4] sm:$0xf]
        %v672 = vld [vmem:[#allocation2 + $0x1a8] sm:$0xf]
        %v673 = vld [vmem:[#allocation2 + $0x1ac] sm:$0xf]
        %v674 = vld [vmem:[#allocation2 + $0x1b0] sm:$0xf]
        %v675 = vld [vmem:[#allocation2 + $0x1b4] sm:$0xf]
        %v676 = vld [vmem:[#allocation2 + $0x1b8] sm:$0xf]
        %v677 = vld [vmem:[#allocation2 + $0x1bc] sm:$0xf]
        %v678 = vld [vmem:[#allocation2 + $0x1c0] sm:$0xf]
        %v679 = vld [vmem:[#allocation2 + $0x1c4] sm:$0xf]
        %v680 = vld [vmem:[#allocation2 + $0x1c8] sm:$0xf]
        %v681 = vld [vmem:[#allocation2 + $0x1cc] sm:$0xf]
        %v682 = vld [vmem:[#allocation2 + $0x1d0] sm:$0xf]
        %v683 = vld [vmem:[#allocation2 + $0x1d4] sm:$0xf]
        %v684 = vld [vmem:[#allocation2 + $0x1d8] sm:$0xf]
        %v685 = vld [vmem:[#allocation2 + $0x1dc] sm:$0xf]
        %v686 = vld [vmem:[#allocation2 + $0x1e0] sm:$0xf]
        %v687 = vld [vmem:[#allocation2 + $0x1e4] sm:$0xf]
        %v688 = vld [vmem:[#allocation2 + $0x1e8] sm:$0xf]
        %v689 = vld [vmem:[#allocation2 + $0x1ec] sm:$0xf]
        %v690 = vld [vmem:[#allocation2 + $0x1f0] sm:$0xf]
        %v691 = vld [vmem:[#allocation2 + $0x1f4] sm:$0xf]
        %v692 = vld [vmem:[#allocation2 + $0x1f8] sm:$0xf]
        %v693 = vld [vmem:[#allocation2 + $0x1fc] sm:$0xf]
        %695 = vset.pattern.permute.xlu0 0
        %696 = vperm.xlu0 %695, %v550
        %v697 = vpop.permute.xlu0 %696
        %700 = vset.pattern.permute.xlu0 0
        %701 = vperm.xlu0 %700, %v551
        %v702 = vpop.permute.xlu0 %701
        %705 = vset.pattern.permute.xlu0 0
        %706 = vperm.xlu0 %705, %v552
        %v707 = vpop.permute.xlu0 %706
        %710 = vset.pattern.permute.xlu0 0
        %711 = vperm.xlu0 %710, %v553
        %v712 = vpop.permute.xlu0 %711
        %715 = vset.pattern.permute.xlu0 0
        %716 = vperm.xlu0 %715, %v554
        %v717 = vpop.permute.xlu0 %716
        %720 = vset.pattern.permute.xlu0 0
        %721 = vperm.xlu0 %720, %v555
        %v722 = vpop.permute.xlu0 %721
        %725 = vset.pattern.permute.xlu0 0
        %726 = vperm.xlu0 %725, %v556
        %v727 = vpop.permute.xlu0 %726
        %730 = vset.pattern.permute.xlu0 0
        %731 = vperm.xlu0 %730, %v557
        %v732 = vpop.permute.xlu0 %731
        %735 = vset.pattern.permute.xlu0 0
        %736 = vperm.xlu0 %735, %v558
        %v737 = vpop.permute.xlu0 %736
        %740 = vset.pattern.permute.xlu0 0
        %741 = vperm.xlu0 %740, %v559
        %v742 = vpop.permute.xlu0 %741
        %745 = vset.pattern.permute.xlu0 0
        %746 = vperm.xlu0 %745, %v560
        %v747 = vpop.permute.xlu0 %746
        %750 = vset.pattern.permute.xlu0 0
        %751 = vperm.xlu0 %750, %v561
        %v752 = vpop.permute.xlu0 %751
        %755 = vset.pattern.permute.xlu0 0
        %756 = vperm.xlu0 %755, %v562
        %v757 = vpop.permute.xlu0 %756
        %760 = vset.pattern.permute.xlu0 0
        %761 = vperm.xlu0 %760, %v563
        %v762 = vpop.permute.xlu0 %761
        %765 = vset.pattern.permute.xlu0 0
        %766 = vperm.xlu0 %765, %v564
        %v767 = vpop.permute.xlu0 %766
        %770 = vset.pattern.permute.xlu0 0
        %771 = vperm.xlu0 %770, %v565
        %v772 = vpop.permute.xlu0 %771
        %v790 = vunpack.c.l.b16 %v534
        %v791 = vunpack.c.l.b16 %v535
        %v792 = vunpack.c.l.b16 %v536
        %v793 = vunpack.c.l.b16 %v537
        %v794 = vunpack.c.l.b16 %v538
        %v795 = vunpack.c.l.b16 %v539
        %v796 = vunpack.c.l.b16 %v540
        %v797 = vunpack.c.l.b16 %v541
        %v798 = vunpack.c.l.b16 %v542
        %v799 = vunpack.c.l.b16 %v543
        %v800 = vunpack.c.l.b16 %v544
        %v801 = vunpack.c.l.b16 %v545
        %v802 = vunpack.c.l.b16 %v546
        %v803 = vunpack.c.l.b16 %v547
        %v804 = vunpack.c.l.b16 %v548
        %v805 = vunpack.c.l.b16 %v549
        %v806 = vpack.c.b16 %v791, %v790
        %v807 = vpack.c.b16 %v793, %v792
        %v808 = vpack.c.b16 %v795, %v794
        %v809 = vpack.c.b16 %v797, %v796
        %v810 = vpack.c.b16 %v799, %v798
        %v811 = vpack.c.b16 %v801, %v800
        %v812 = vpack.c.b16 %v803, %v802
        %v813 = vpack.c.b16 %v805, %v804
        %vm814 = vcmask 523264
        %v816 = vsel %vm814, %v806, 0
        %v819 = vsel %vm814, %v807, 0
        %v822 = vsel %vm814, %v808, 0
        %v825 = vsel %vm814, %v809, 0
        %v828 = vsel %vm814, %v810, 0
        %v831 = vsel %vm814, %v811, 0
        %v834 = vsel %vm814, %v812, 0
        %v837 = vsel %vm814, %v813, 0
        %839 = vmatprep.subr.bf16.mxu0 0
        %840 = vmatpush1.bf16.msra.mxu0 %v530
        %841 = vmatprep.subr.bf16.mxu0 0
        %842 = vmatpush1.bf16.msra.mxu0 %v531
        %843 = vmatprep.subr.bf16.mxu0 0
        %844 = vmatpush1.bf16.msra.mxu0 %v532
        %845 = vmatprep.subr.bf16.mxu0 0
        %846 = vmatpush1.bf16.msra.mxu0 %v533
        %847 = vmatprep.subr.bf16.mxu0 0
        %848 = vmatpush1.bf16.msra.mxu0 0
        %849 = vmatprep.subr.bf16.mxu0 0
        %850 = vmatpush1.bf16.msra.mxu0 0
        %851 = vmatprep.subr.bf16.mxu0 0
        %852 = vmatpush1.bf16.msra.mxu0 0
        %853 = vmatprep.subr.bf16.mxu0 0
        %854 = vmatpush1.bf16.msra.mxu0 0
        %855 = vmatprep.subr.bf16.mxu0 0
        %856 = vmatpush1.bf16.msra.mxu0 0
        %857 = vmatprep.subr.bf16.mxu0 0
        %858 = vmatpush1.bf16.msra.mxu0 0
        %859 = vmatprep.subr.bf16.mxu0 0
        %860 = vmatpush1.bf16.msra.mxu0 0
        %861 = vmatprep.subr.bf16.mxu0 0
        %862 = vmatpush1.bf16.msra.mxu0 0
        %863 = vmatprep.subr.bf16.mxu0 0
        %864 = vmatpush1.bf16.msra.mxu0 0
        %865 = vmatprep.subr.bf16.mxu0 0
        %866 = vmatpush1.bf16.msra.mxu0 0
        %867 = vmatprep.subr.bf16.mxu0 0
        %868 = vmatpush1.bf16.msra.mxu0 0
        %869 = vmatprep.subr.bf16.mxu0 0
        %870 = vmatpush1.bf16.msra.mxu0 0
        %871 = vmatprep.mubr.bf16.mxu0 0
        %872 = vmatmul.mubr.bf16.gmra.mrb[0].mxu0 %v816
        %v873 = vpop.f32.mrb[0].mxu0
        %v874 = vadd.f32 %v697, %v873
        %v875 = vpop.f32.mrb[0].mxu0
        %v876 = vpop.f32.mrb[0].mxu0
        %v877 = vadd.f32 %v702, %v876
        %v878 = vpop.f32.mrb[0].mxu0
        %879 = vmatprep.mubr.bf16.mxu0 0
        %880 = vmatmul.mubr.bf16.gmra.mrb[0].mxu0 %v819
        %v881 = vpop.f32.mrb[0].mxu0
        %v882 = vadd.f32 %v707, %v881
        %v883 = vpop.f32.mrb[0].mxu0
        %v884 = vpop.f32.mrb[0].mxu0
        %v885 = vadd.f32 %v712, %v884
        %v886 = vpop.f32.mrb[0].mxu0
        %887 = vmatprep.mubr.bf16.mxu0 0
        %888 = vmatmul.mubr.bf16.gmra.mrb[0].mxu0 %v822
        %v889 = vpop.f32.mrb[0].mxu0
        %v890 = vadd.f32 %v717, %v889
        %v891 = vpop.f32.mrb[0].mxu0
        %v892 = vpop.f32.mrb[0].mxu0
        %v893 = vadd.f32 %v722, %v892
        %v894 = vpop.f32.mrb[0].mxu0
        %895 = vmatprep.mubr.bf16.mxu0 0
        %896 = vmatmul.mubr.bf16.gmra.mrb[0].mxu0 %v825
        %v897 = vpop.f32.mrb[0].mxu0
        %v898 = vadd.f32 %v727, %v897
        %v899 = vpop.f32.mrb[0].mxu0
        %v900 = vpop.f32.mrb[0].mxu0
        %v901 = vadd.f32 %v732, %v900
        %v902 = vpop.f32.mrb[0].mxu0
        %903 = vmatprep.mubr.bf16.mxu0 0
        %904 = vmatmul.mubr.bf16.gmra.mrb[0].mxu0 %v828
        %v905 = vpop.f32.mrb[0].mxu0
        %v906 = vadd.f32 %v737, %v905
        %v907 = vpop.f32.mrb[0].mxu0
        %v908 = vpop.f32.mrb[0].mxu0
        %v909 = vadd.f32 %v742, %v908
        %v910 = vpop.f32.mrb[0].mxu0
        %911 = vmatprep.mubr.bf16.mxu0 0
        %912 = vmatmul.mubr.bf16.gmra.mrb[0].mxu0 %v831
        %v913 = vpop.f32.mrb[0].mxu0
        %v914 = vadd.f32 %v747, %v913
        %v915 = vpop.f32.mrb[0].mxu0
        %v916 = vpop.f32.mrb[0].mxu0
        %v917 = vadd.f32 %v752, %v916
        %v918 = vpop.f32.mrb[0].mxu0
        %919 = vmatprep.mubr.bf16.mxu0 0
        %920 = vmatmul.mubr.bf16.gmra.mrb[0].mxu0 %v834
        %v921 = vpop.f32.mrb[0].mxu0
        %v922 = vadd.f32 %v757, %v921
        %v923 = vpop.f32.mrb[0].mxu0
        %v924 = vpop.f32.mrb[0].mxu0
        %v925 = vadd.f32 %v762, %v924
        %v926 = vpop.f32.mrb[0].mxu0
        %927 = vmatprep.mubr.bf16.mxu0 0
        %928 = vmatmul.mubr.bf16.gmra.mrb[0].mxu0 %v837
        %v929 = vpop.f32.mrb[0].mxu0
        %v930 = vadd.f32 %v767, %v929
        %v931 = vpop.f32.mrb[0].mxu0
        %v932 = vpop.f32.mrb[0].mxu0
        %v933 = vadd.f32 %v772, %v932
        %v934 = vpop.f32.mrb[0].mxu0
        %935 = vdwg.mxu0
        %v936 = vmax.f32 %v874, 0.0
        %v937 = vmax.f32 %v877, 0.0
        %v938 = vmax.f32 %v882, 0.0
        %v939 = vmax.f32 %v885, 0.0
        %v940 = vmax.f32 %v890, 0.0
        %v941 = vmax.f32 %v893, 0.0
        %v942 = vmax.f32 %v898, 0.0
        %v943 = vmax.f32 %v901, 0.0
        %v944 = vmax.f32 %v906, 0.0
        %v945 = vmax.f32 %v909, 0.0
        %v946 = vmax.f32 %v914, 0.0
        %v947 = vmax.f32 %v917, 0.0
        %v948 = vmax.f32 %v922, 0.0
        %v949 = vmax.f32 %v925, 0.0
        %v950 = vmax.f32 %v930, 0.0
        %v951 = vmax.f32 %v933, 0.0
        %v952 = vpack.c.bf16 %v937, %v936
        %v953 = vpack.c.bf16 %v939, %v938
        %v954 = vpack.c.bf16 %v941, %v940
        %v955 = vpack.c.bf16 %v943, %v942
        %v956 = vpack.c.bf16 %v945, %v944
        %v957 = vpack.c.bf16 %v947, %v946
        %v958 = vpack.c.bf16 %v949, %v948
        %v959 = vpack.c.bf16 %v951, %v950
        %v1088 = vunpack.c.l.b16 %v566
        %v1089 = vunpack.c.l.b16 %v567
        %v1090 = vunpack.c.l.b16 %v568
        %v1091 = vunpack.c.l.b16 %v569
        %v1092 = vunpack.c.l.b16 %v570
        %v1093 = vunpack.c.l.b16 %v571
        %v1094 = vunpack.c.l.b16 %v572
        %v1095 = vunpack.c.l.b16 %v573
        %v1096 = vunpack.c.l.b16 %v574
        %v1097 = vunpack.c.l.b16 %v575
        %v1098 = vunpack.c.l.b16 %v576
        %v1099 = vunpack.c.l.b16 %v577
        %v1100 = vunpack.c.l.b16 %v578
        %v1101 = vunpack.c.l.b16 %v579
        %v1102 = vunpack.c.l.b16 %v580
        %v1103 = vunpack.c.l.b16 %v581
        %v1104 = vunpack.c.l.b16 %v582
        %v1105 = vunpack.c.l.b16 %v583
        %v1106 = vunpack.c.l.b16 %v584
        %v1107 = vunpack.c.l.b16 %v585
        %v1108 = vunpack.c.l.b16 %v586
        %v1109 = vunpack.c.l.b16 %v587
        %v1110 = vunpack.c.l.b16 %v588
        %v1111 = vunpack.c.l.b16 %v589
        %v1112 = vunpack.c.l.b16 %v590
        %v1113 = vunpack.c.l.b16 %v591
        %v1114 = vunpack.c.l.b16 %v592
        %v1115 = vunpack.c.l.b16 %v593
        %v1116 = vunpack.c.l.b16 %v594
        %v1117 = vunpack.c.l.b16 %v595
        %v1118 = vunpack.c.l.b16 %v596
        %v1119 = vunpack.c.l.b16 %v597
        %v1120 = vunpack.c.l.b16 %v598
        %v1121 = vunpack.c.l.b16 %v599
        %v1122 = vunpack.c.l.b16 %v600
        %v1123 = vunpack.c.l.b16 %v601
        %v1124 = vunpack.c.l.b16 %v602
        %v1125 = vunpack.c.l.b16 %v603
        %v1126 = vunpack.c.l.b16 %v604
        %v1127 = vunpack.c.l.b16 %v605
        %v1128 = vunpack.c.l.b16 %v606
        %v1129 = vunpack.c.l.b16 %v607
        %v1130 = vunpack.c.l.b16 %v608
        %v1131 = vunpack.c.l.b16 %v609
        %v1132 = vunpack.c.l.b16 %v610
        %v1133 = vunpack.c.l.b16 %v611
        %v1134 = vunpack.c.l.b16 %v612
        %v1135 = vunpack.c.l.b16 %v613
        %v1136 = vunpack.c.l.b16 %v614
        %v1137 = vunpack.c.l.b16 %v615
        %v1138 = vunpack.c.l.b16 %v616
        %v1139 = vunpack.c.l.b16 %v617
        %v1140 = vunpack.c.l.b16 %v618
        %v1141 = vunpack.c.l.b16 %v619
        %v1142 = vunpack.c.l.b16 %v620
        %v1143 = vunpack.c.l.b16 %v621
        %v1144 = vunpack.c.l.b16 %v622
        %v1145 = vunpack.c.l.b16 %v623
        %v1146 = vunpack.c.l.b16 %v624
        %v1147 = vunpack.c.l.b16 %v625
        %v1148 = vunpack.c.l.b16 %v626
        %v1149 = vunpack.c.l.b16 %v627
        %v1150 = vunpack.c.l.b16 %v628
        %v1151 = vunpack.c.l.b16 %v629
        %v1152 = vunpack.c.l.b16 %v630
        %v1153 = vunpack.c.l.b16 %v631
        %v1154 = vunpack.c.l.b16 %v632
        %v1155 = vunpack.c.l.b16 %v633
        %v1156 = vunpack.c.l.b16 %v634
        %v1157 = vunpack.c.l.b16 %v635
        %v1158 = vunpack.c.l.b16 %v636
        %v1159 = vunpack.c.l.b16 %v637
        %v1160 = vunpack.c.l.b16 %v638
        %v1161 = vunpack.c.l.b16 %v639
        %v1162 = vunpack.c.l.b16 %v640
        %v1163 = vunpack.c.l.b16 %v641
        %v1164 = vunpack.c.l.b16 %v642
        %v1165 = vunpack.c.l.b16 %v643
        %v1166 = vunpack.c.l.b16 %v644
        %v1167 = vunpack.c.l.b16 %v645
        %v1168 = vunpack.c.l.b16 %v646
        %v1169 = vunpack.c.l.b16 %v647
        %v1170 = vunpack.c.l.b16 %v648
        %v1171 = vunpack.c.l.b16 %v649
        %v1172 = vunpack.c.l.b16 %v650
        %v1173 = vunpack.c.l.b16 %v651
        %v1174 = vunpack.c.l.b16 %v652
        %v1175 = vunpack.c.l.b16 %v653
        %v1176 = vunpack.c.l.b16 %v654
        %v1177 = vunpack.c.l.b16 %v655
        %v1178 = vunpack.c.l.b16 %v656
        %v1179 = vunpack.c.l.b16 %v657
        %v1180 = vunpack.c.l.b16 %v658
        %v1181 = vunpack.c.l.b16 %v659
        %v1182 = vunpack.c.l.b16 %v660
        %v1183 = vunpack.c.l.b16 %v661
        %v1184 = vunpack.c.l.b16 %v662
        %v1185 = vunpack.c.l.b16 %v663
        %v1186 = vunpack.c.l.b16 %v664
        %v1187 = vunpack.c.l.b16 %v665
        %v1188 = vunpack.c.l.b16 %v666
        %v1189 = vunpack.c.l.b16 %v667
        %v1190 = vunpack.c.l.b16 %v668
        %v1191 = vunpack.c.l.b16 %v669
        %v1192 = vunpack.c.l.b16 %v670
        %v1193 = vunpack.c.l.b16 %v671
        %v1194 = vunpack.c.l.b16 %v672
        %v1195 = vunpack.c.l.b16 %v673
        %v1196 = vunpack.c.l.b16 %v674
        %v1197 = vunpack.c.l.b16 %v675
        %v1198 = vunpack.c.l.b16 %v676
        %v1199 = vunpack.c.l.b16 %v677
        %v1200 = vunpack.c.l.b16 %v678
        %v1201 = vunpack.c.l.b16 %v679
        %v1202 = vunpack.c.l.b16 %v680
        %v1203 = vunpack.c.l.b16 %v681
        %v1204 = vunpack.c.l.b16 %v682
        %v1205 = vunpack.c.l.b16 %v683
        %v1206 = vunpack.c.l.b16 %v684
        %v1207 = vunpack.c.l.b16 %v685
        %v1208 = vunpack.c.l.b16 %v686
        %v1209 = vunpack.c.l.b16 %v687
        %v1210 = vunpack.c.l.b16 %v688
        %v1211 = vunpack.c.l.b16 %v689
        %v1212 = vunpack.c.l.b16 %v690
        %v1213 = vunpack.c.l.b16 %v691
        %v1214 = vunpack.c.l.b16 %v692
        %v1215 = vunpack.c.l.b16 %v693
        %v1216 = vpack.c.b16 %v1089, %v1088
        %v1217 = vpack.c.b16 %v1091, %v1090
        %v1218 = vpack.c.b16 %v1093, %v1092
        %v1219 = vpack.c.b16 %v1095, %v1094
        %v1220 = vpack.c.b16 %v1097, %v1096
        %v1221 = vpack.c.b16 %v1099, %v1098
        %v1222 = vpack.c.b16 %v1101, %v1100
        %v1223 = vpack.c.b16 %v1103, %v1102
        %v1224 = vpack.c.b16 %v1105, %v1104
        %v1225 = vpack.c.b16 %v1107, %v1106
        %v1226 = vpack.c.b16 %v1109, %v1108
        %v1227 = vpack.c.b16 %v1111, %v1110
        %v1228 = vpack.c.b16 %v1113, %v1112
        %v1229 = vpack.c.b16 %v1115, %v1114
        %v1230 = vpack.c.b16 %v1117, %v1116
        %v1231 = vpack.c.b16 %v1119, %v1118
        %v1232 = vpack.c.b16 %v1121, %v1120
        %v1233 = vpack.c.b16 %v1123, %v1122
        %v1234 = vpack.c.b16 %v1125, %v1124
        %v1235 = vpack.c.b16 %v1127, %v1126
        %v1236 = vpack.c.b16 %v1129, %v1128
        %v1237 = vpack.c.b16 %v1131, %v1130
        %v1238 = vpack.c.b16 %v1133, %v1132
        %v1239 = vpack.c.b16 %v1135, %v1134
        %v1240 = vpack.c.b16 %v1137, %v1136
        %v1241 = vpack.c.b16 %v1139, %v1138
        %v1242 = vpack.c.b16 %v1141, %v1140
        %v1243 = vpack.c.b16 %v1143, %v1142
        %v1244 = vpack.c.b16 %v1145, %v1144
        %v1245 = vpack.c.b16 %v1147, %v1146
        %v1246 = vpack.c.b16 %v1149, %v1148
        %v1247 = vpack.c.b16 %v1151, %v1150
        %v1248 = vpack.c.b16 %v1153, %v1152
        %v1249 = vpack.c.b16 %v1155, %v1154
        %v1250 = vpack.c.b16 %v1157, %v1156
        %v1251 = vpack.c.b16 %v1159, %v1158
        %v1252 = vpack.c.b16 %v1161, %v1160
        %v1253 = vpack.c.b16 %v1163, %v1162
        %v1254 = vpack.c.b16 %v1165, %v1164
        %v1255 = vpack.c.b16 %v1167, %v1166
        %v1256 = vpack.c.b16 %v1169, %v1168
        %v1257 = vpack.c.b16 %v1171, %v1170
        %v1258 = vpack.c.b16 %v1173, %v1172
        %v1259 = vpack.c.b16 %v1175, %v1174
        %v1260 = vpack.c.b16 %v1177, %v1176
        %v1261 = vpack.c.b16 %v1179, %v1178
        %v1262 = vpack.c.b16 %v1181, %v1180
        %v1263 = vpack.c.b16 %v1183, %v1182
        %v1264 = vpack.c.b16 %v1185, %v1184
        %v1265 = vpack.c.b16 %v1187, %v1186
        %v1266 = vpack.c.b16 %v1189, %v1188
        %v1267 = vpack.c.b16 %v1191, %v1190
        %v1268 = vpack.c.b16 %v1193, %v1192
        %v1269 = vpack.c.b16 %v1195, %v1194
        %v1270 = vpack.c.b16 %v1197, %v1196
        %v1271 = vpack.c.b16 %v1199, %v1198
        %v1272 = vpack.c.b16 %v1201, %v1200
        %v1273 = vpack.c.b16 %v1203, %v1202
        %v1274 = vpack.c.b16 %v1205, %v1204
        %v1275 = vpack.c.b16 %v1207, %v1206
        %v1276 = vpack.c.b16 %v1209, %v1208
        %v1277 = vpack.c.b16 %v1211, %v1210
        %v1278 = vpack.c.b16 %v1213, %v1212
        %v1279 = vpack.c.b16 %v1215, %v1214
        %1344 = vmatprep.subr.bf16.mxu0 0
        %1345 = vmatpush1.bf16.msra.mxu0 %v952
        %1346 = vmatprep.subr.bf16.mxu0 0
        %1347 = vmatpush1.bf16.msra.mxu0 %v953
        %1348 = vmatprep.subr.bf16.mxu0 0
        %1349 = vmatpush1.bf16.msra.mxu0 %v954
        %1350 = vmatprep.subr.bf16.mxu0 0
        %1351 = vmatpush1.bf16.msra.mxu0 %v955
        %1352 = vmatprep.subr.bf16.mxu0 0
        %1353 = vmatpush1.bf16.msra.mxu0 %v956
        %1354 = vmatprep.subr.bf16.mxu0 0
        %1355 = vmatpush1.bf16.msra.mxu0 %v957
        %1356 = vmatprep.subr.bf16.mxu0 0
        %1357 = vmatpush1.bf16.msra.mxu0 %v958
        %1358 = vmatprep.subr.bf16.mxu0 0
        %1359 = vmatpush1.bf16.msra.mxu0 %v959
        %1360 = vmatprep.subr.bf16.mxu0 0
        %1361 = vmatpush1.bf16.msra.mxu0 0
        %1362 = vmatprep.subr.bf16.mxu0 0
        %1363 = vmatpush1.bf16.msra.mxu0 0
        %1364 = vmatprep.subr.bf16.mxu0 0
        %1365 = vmatpush1.bf16.msra.mxu0 0
        %1366 = vmatprep.subr.bf16.mxu0 0
        %1367 = vmatpush1.bf16.msra.mxu0 0
        %1368 = vmatprep.subr.bf16.mxu0 0
        %1369 = vmatpush1.bf16.msra.mxu0 0
        %1370 = vmatprep.subr.bf16.mxu0 0
        %1371 = vmatpush1.bf16.msra.mxu0 0
        %1372 = vmatprep.subr.bf16.mxu0 0
        %1373 = vmatpush1.bf16.msra.mxu0 0
        %1374 = vmatprep.subr.bf16.mxu0 0
        %1375 = vmatpush1.bf16.msra.mxu0 0
        %1376 = vmatprep.mubr.bf16.mxu0 0
        %1377 = vmatmul.mubr.bf16.gmra.mrb[0].mxu0 %v1216
        %v1378 = vpop.f32.mrb[0].mxu0
        %v1379 = vadd.f32 0.0, %v1378
        %v1380 = vpop.f32.mrb[0].mxu0
        %v1381 = vpop.f32.mrb[0].mxu0
        %v1382 = vadd.f32 0.0, %v1381
        %v1383 = vpop.f32.mrb[0].mxu0
        %1384 = vmatprep.mubr.bf16.mxu0 0
        %1385 = vmatmul.mubr.bf16.gmra.mrb[0].mxu0 %v1217
        %v1386 = vpop.f32.mrb[0].mxu0
        %v1387 = vadd.f32 0.0, %v1386
        %v1388 = vpop.f32.mrb[0].mxu0
        %v1389 = vpop.f32.mrb[0].mxu0
        %v1390 = vadd.f32 0.0, %v1389
        %v1391 = vpop.f32.mrb[0].mxu0
        %1392 = vmatprep.mubr.bf16.mxu0 0
        %1393 = vmatmul.mubr.bf16.gmra.mrb[0].mxu0 %v1218
        %v1394 = vpop.f32.mrb[0].mxu0
        %v1395 = vadd.f32 0.0, %v1394
        %v1396 = vpop.f32.mrb[0].mxu0
        %v1397 = vpop.f32.mrb[0].mxu0
        %v1398 = vadd.f32 0.0, %v1397
        %v1399 = vpop.f32.mrb[0].mxu0
        %1400 = vmatprep.mubr.bf16.mxu0 0
        %1401 = vmatmul.mubr.bf16.gmra.mrb[0].mxu0 %v1219
        %v1402 = vpop.f32.mrb[0].mxu0
        %v1403 = vadd.f32 0.0, %v1402
        %v1404 = vpop.f32.mrb[0].mxu0
        %v1405 = vpop.f32.mrb[0].mxu0
        %v1406 = vadd.f32 0.0, %v1405
        %v1407 = vpop.f32.mrb[0].mxu0
        %1408 = vmatprep.mubr.bf16.mxu0 0
        %1409 = vmatmul.mubr.bf16.gmra.mrb[0].mxu0 %v1220
        %v1410 = vpop.f32.mrb[0].mxu0
        %v1411 = vadd.f32 0.0, %v1410
        %v1412 = vpop.f32.mrb[0].mxu0
        %v1413 = vpop.f32.mrb[0].mxu0
        %v1414 = vadd.f32 0.0, %v1413
        %v1415 = vpop.f32.mrb[0].mxu0
        %1416 = vmatprep.mubr.bf16.mxu0 0
        %1417 = vmatmul.mubr.bf16.gmra.mrb[0].mxu0 %v1221
        %v1418 = vpop.f32.mrb[0].mxu0
        %v1419 = vadd.f32 0.0, %v1418
        %v1420 = vpop.f32.mrb[0].mxu0
        %v1421 = vpop.f32.mrb[0].mxu0
        %v1422 = vadd.f32 0.0, %v1421
        %v1423 = vpop.f32.mrb[0].mxu0
        %1424 = vmatprep.mubr.bf16.mxu0 0
        %1425 = vmatmul.mubr.bf16.gmra.mrb[0].mxu0 %v1222
        %v1426 = vpop.f32.mrb[0].mxu0
        %v1427 = vadd.f32 0.0, %v1426
        %v1428 = vpop.f32.mrb[0].mxu0
        %v1429 = vpop.f32.mrb[0].mxu0
        %v1430 = vadd.f32 0.0, %v1429
        %v1431 = vpop.f32.mrb[0].mxu0
        %1432 = vmatprep.mubr.bf16.mxu0 0
        %1433 = vmatmul.mubr.bf16.gmra.mrb[0].mxu0 %v1223
        %v1434 = vpop.f32.mrb[0].mxu0
        %v1435 = vadd.f32 0.0, %v1434
        %v1436 = vpop.f32.mrb[0].mxu0
        %v1437 = vpop.f32.mrb[0].mxu0
        %v1438 = vadd.f32 0.0, %v1437
        %v1439 = vpop.f32.mrb[0].mxu0
        %1440 = vmatprep.mubr.bf16.mxu0 0
        %1441 = vmatmul.mubr.bf16.gmra.mrb[0].mxu0 %v1224
        %v1442 = vpop.f32.mrb[0].mxu0
        %v1443 = vadd.f32 0.0, %v1442
        %v1444 = vpop.f32.mrb[0].mxu0
        %v1445 = vpop.f32.mrb[0].mxu0
        %v1446 = vadd.f32 0.0, %v1445
        %v1447 = vpop.f32.mrb[0].mxu0
        %1448 = vmatprep.mubr.bf16.mxu0 0
        %1449 = vmatmul.mubr.bf16.gmra.mrb[0].mxu0 %v1225
        %v1450 = vpop.f32.mrb[0].mxu0
        %v1451 = vadd.f32 0.0, %v1450
        %v1452 = vpop.f32.mrb[0].mxu0
        %v1453 = vpop.f32.mrb[0].mxu0
        %v1454 = vadd.f32 0.0, %v1453
        %v1455 = vpop.f32.mrb[0].mxu0
        %1456 = vmatprep.mubr.bf16.mxu0 0
        %1457 = vmatmul.mubr.bf16.gmra.mrb[0].mxu0 %v1226
        %v1458 = vpop.f32.mrb[0].mxu0
        %v1459 = vadd.f32 0.0, %v1458
        %v1460 = vpop.f32.mrb[0].mxu0
        %v1461 = vpop.f32.mrb[0].mxu0
        %v1462 = vadd.f32 0.0, %v1461
        %v1463 = vpop.f32.mrb[0].mxu0
        %1464 = vmatprep.mubr.bf16.mxu0 0
        %1465 = vmatmul.mubr.bf16.gmra.mrb[0].mxu0 %v1227
        %v1466 = vpop.f32.mrb[0].mxu0
        %v1467 = vadd.f32 0.0, %v1466
        %v1468 = vpop.f32.mrb[0].mxu0
        %v1469 = vpop.f32.mrb[0].mxu0
        %v1470 = vadd.f32 0.0, %v1469
        %v1471 = vpop.f32.mrb[0].mxu0
        %1472 = vmatprep.mubr.bf16.mxu0 0
        %1473 = vmatmul.mubr.bf16.gmra.mrb[0].mxu0 %v1228
        %v1474 = vpop.f32.mrb[0].mxu0
        %v1475 = vadd.f32 0.0, %v1474
        %v1476 = vpop.f32.mrb[0].mxu0
        %v1477 = vpop.f32.mrb[0].mxu0
        %v1478 = vadd.f32 0.0, %v1477
        %v1479 = vpop.f32.mrb[0].mxu0
        %1480 = vmatprep.mubr.bf16.mxu0 0
        %1481 = vmatmul.mubr.bf16.gmra.mrb[0].mxu0 %v1229
        %v1482 = vpop.f32.mrb[0].mxu0
        %v1483 = vadd.f32 0.0, %v1482
        %v1484 = vpop.f32.mrb[0].mxu0
        %v1485 = vpop.f32.mrb[0].mxu0
        %v1486 = vadd.f32 0.0, %v1485
        %v1487 = vpop.f32.mrb[0].mxu0
        %1488 = vmatprep.mubr.bf16.mxu0 0
        %1489 = vmatmul.mubr.bf16.gmra.mrb[0].mxu0 %v1230
        %v1490 = vpop.f32.mrb[0].mxu0
        %v1491 = vadd.f32 0.0, %v1490
        %v1492 = vpop.f32.mrb[0].mxu0
        %v1493 = vpop.f32.mrb[0].mxu0
        %v1494 = vadd.f32 0.0, %v1493
        %v1495 = vpop.f32.mrb[0].mxu0
        %1496 = vmatprep.mubr.bf16.mxu0 0
        %1497 = vmatmul.mubr.bf16.gmra.mrb[0].mxu0 %v1231
        %v1498 = vpop.f32.mrb[0].mxu0
        %v1499 = vadd.f32 0.0, %v1498
        %v1500 = vpop.f32.mrb[0].mxu0
        %v1501 = vpop.f32.mrb[0].mxu0
        %v1502 = vadd.f32 0.0, %v1501
        %v1503 = vpop.f32.mrb[0].mxu0
        %1504 = vmatprep.mubr.bf16.mxu0 0
        %1505 = vmatmul.mubr.bf16.gmra.mrb[0].mxu0 %v1232
        %v1506 = vpop.f32.mrb[0].mxu0
        %v1507 = vadd.f32 0.0, %v1506
        %v1508 = vpop.f32.mrb[0].mxu0
        %v1509 = vpop.f32.mrb[0].mxu0
        %v1510 = vadd.f32 0.0, %v1509
        %v1511 = vpop.f32.mrb[0].mxu0
        %1512 = vmatprep.mubr.bf16.mxu0 0
        %1513 = vmatmul.mubr.bf16.gmra.mrb[0].mxu0 %v1233
        %v1514 = vpop.f32.mrb[0].mxu0
        %v1515 = vadd.f32 0.0, %v1514
        %v1516 = vpop.f32.mrb[0].mxu0
        %v1517 = vpop.f32.mrb[0].mxu0
        %v1518 = vadd.f32 0.0, %v1517
        %v1519 = vpop.f32.mrb[0].mxu0
        %1520 = vmatprep.mubr.bf16.mxu0 0
        %1521 = vmatmul.mubr.bf16.gmra.mrb[0].mxu0 %v1234
        %v1522 = vpop.f32.mrb[0].mxu0
        %v1523 = vadd.f32 0.0, %v1522
        %v1524 = vpop.f32.mrb[0].mxu0
        %v1525 = vpop.f32.mrb[0].mxu0
        %v1526 = vadd.f32 0.0, %v1525
        %v1527 = vpop.f32.mrb[0].mxu0
        %1528 = vmatprep.mubr.bf16.mxu0 0
        %1529 = vmatmul.mubr.bf16.gmra.mrb[0].mxu0 %v1235
        %v1530 = vpop.f32.mrb[0].mxu0
        %v1531 = vadd.f32 0.0, %v1530
        %v1532 = vpop.f32.mrb[0].mxu0
        %v1533 = vpop.f32.mrb[0].mxu0
        %v1534 = vadd.f32 0.0, %v1533
        %v1535 = vpop.f32.mrb[0].mxu0
        %1536 = vmatprep.mubr.bf16.mxu0 0
        %1537 = vmatmul.mubr.bf16.gmra.mrb[0].mxu0 %v1236
        %v1538 = vpop.f32.mrb[0].mxu0
        %v1539 = vadd.f32 0.0, %v1538
        %v1540 = vpop.f32.mrb[0].mxu0
        %v1541 = vpop.f32.mrb[0].mxu0
        %v1542 = vadd.f32 0.0, %v1541
        %v1543 = vpop.f32.mrb[0].mxu0
        %1544 = vmatprep.mubr.bf16.mxu0 0
        %1545 = vmatmul.mubr.bf16.gmra.mrb[0].mxu0 %v1237
        %v1546 = vpop.f32.mrb[0].mxu0
        %v1547 = vadd.f32 0.0, %v1546
        %v1548 = vpop.f32.mrb[0].mxu0
        %v1549 = vpop.f32.mrb[0].mxu0
        %v1550 = vadd.f32 0.0, %v1549
        %v1551 = vpop.f32.mrb[0].mxu0
        %1552 = vmatprep.mubr.bf16.mxu0 0
        %1553 = vmatmul.mubr.bf16.gmra.mrb[0].mxu0 %v1238
        %v1554 = vpop.f32.mrb[0].mxu0
        %v1555 = vadd.f32 0.0, %v1554
        %v1556 = vpop.f32.mrb[0].mxu0
        %v1557 = vpop.f32.mrb[0].mxu0
        %v1558 = vadd.f32 0.0, %v1557
        %v1559 = vpop.f32.mrb[0].mxu0
        %1560 = vmatprep.mubr.bf16.mxu0 0
        %1561 = vmatmul.mubr.bf16.gmra.mrb[0].mxu0 %v1239
        %v1562 = vpop.f32.mrb[0].mxu0
        %v1563 = vadd.f32 0.0, %v1562
        %v1564 = vpop.f32.mrb[0].mxu0
        %v1565 = vpop.f32.mrb[0].mxu0
        %v1566 = vadd.f32 0.0, %v1565
        %v1567 = vpop.f32.mrb[0].mxu0
        %1568 = vmatprep.mubr.bf16.mxu0 0
        %1569 = vmatmul.mubr.bf16.gmra.mrb[0].mxu0 %v1240
        %v1570 = vpop.f32.mrb[0].mxu0
        %v1571 = vadd.f32 0.0, %v1570
        %v1572 = vpop.f32.mrb[0].mxu0
        %v1573 = vpop.f32.mrb[0].mxu0
        %v1574 = vadd.f32 0.0, %v1573
        %v1575 = vpop.f32.mrb[0].mxu0
        %1576 = vmatprep.mubr.bf16.mxu0 0
        %1577 = vmatmul.mubr.bf16.gmra.mrb[0].mxu0 %v1241
        %v1578 = vpop.f32.mrb[0].mxu0
        %v1579 = vadd.f32 0.0, %v1578
        %v1580 = vpop.f32.mrb[0].mxu0
        %v1581 = vpop.f32.mrb[0].mxu0
        %v1582 = vadd.f32 0.0, %v1581
        %v1583 = vpop.f32.mrb[0].mxu0
        %1584 = vmatprep.mubr.bf16.mxu0 0
        %1585 = vmatmul.mubr.bf16.gmra.mrb[0].mxu0 %v1242
        %v1586 = vpop.f32.mrb[0].mxu0
        %v1587 = vadd.f32 0.0, %v1586
        %v1588 = vpop.f32.mrb[0].mxu0
        %v1589 = vpop.f32.mrb[0].mxu0
        %v1590 = vadd.f32 0.0, %v1589
        %v1591 = vpop.f32.mrb[0].mxu0
        %1592 = vmatprep.mubr.bf16.mxu0 0
        %1593 = vmatmul.mubr.bf16.gmra.mrb[0].mxu0 %v1243
        %v1594 = vpop.f32.mrb[0].mxu0
        %v1595 = vadd.f32 0.0, %v1594
        %v1596 = vpop.f32.mrb[0].mxu0
        %v1597 = vpop.f32.mrb[0].mxu0
        %v1598 = vadd.f32 0.0, %v1597
        %v1599 = vpop.f32.mrb[0].mxu0
        %1600 = vmatprep.mubr.bf16.mxu0 0
        %1601 = vmatmul.mubr.bf16.gmra.mrb[0].mxu0 %v1244
        %v1602 = vpop.f32.mrb[0].mxu0
        %v1603 = vadd.f32 0.0, %v1602
        %v1604 = vpop.f32.mrb[0].mxu0
        %v1605 = vpop.f32.mrb[0].mxu0
        %v1606 = vadd.f32 0.0, %v1605
        %v1607 = vpop.f32.mrb[0].mxu0
        %1608 = vmatprep.mubr.bf16.mxu0 0
        %1609 = vmatmul.mubr.bf16.gmra.mrb[0].mxu0 %v1245
        %v1610 = vpop.f32.mrb[0].mxu0
        %v1611 = vadd.f32 0.0, %v1610
        %v1612 = vpop.f32.mrb[0].mxu0
        %v1613 = vpop.f32.mrb[0].mxu0
        %v1614 = vadd.f32 0.0, %v1613
        %v1615 = vpop.f32.mrb[0].mxu0
        %1616 = vmatprep.mubr.bf16.mxu0 0
        %1617 = vmatmul.mubr.bf16.gmra.mrb[0].mxu0 %v1246
        %v1618 = vpop.f32.mrb[0].mxu0
        %v1619 = vadd.f32 0.0, %v1618
        %v1620 = vpop.f32.mrb[0].mxu0
        %v1621 = vpop.f32.mrb[0].mxu0
        %v1622 = vadd.f32 0.0, %v1621
        %v1623 = vpop.f32.mrb[0].mxu0
        %1624 = vmatprep.mubr.bf16.mxu0 0
        %1625 = vmatmul.mubr.bf16.gmra.mrb[0].mxu0 %v1247
        %v1626 = vpop.f32.mrb[0].mxu0
        %v1627 = vadd.f32 0.0, %v1626
        %v1628 = vpop.f32.mrb[0].mxu0
        %v1629 = vpop.f32.mrb[0].mxu0
        %v1630 = vadd.f32 0.0, %v1629
        %v1631 = vpop.f32.mrb[0].mxu0
        %1632 = vmatprep.mubr.bf16.mxu0 0
        %1633 = vmatmul.mubr.bf16.gmra.mrb[0].mxu0 %v1248
        %v1634 = vpop.f32.mrb[0].mxu0
        %v1635 = vadd.f32 0.0, %v1634
        %v1636 = vpop.f32.mrb[0].mxu0
        %v1637 = vpop.f32.mrb[0].mxu0
        %v1638 = vadd.f32 0.0, %v1637
        %v1639 = vpop.f32.mrb[0].mxu0
        %1640 = vmatprep.mubr.bf16.mxu0 0
        %1641 = vmatmul.mubr.bf16.gmra.mrb[0].mxu0 %v1249
        %v1642 = vpop.f32.mrb[0].mxu0
        %v1643 = vadd.f32 0.0, %v1642
        %v1644 = vpop.f32.mrb[0].mxu0
        %v1645 = vpop.f32.mrb[0].mxu0
        %v1646 = vadd.f32 0.0, %v1645
        %v1647 = vpop.f32.mrb[0].mxu0
        %1648 = vmatprep.mubr.bf16.mxu0 0
        %1649 = vmatmul.mubr.bf16.gmra.mrb[0].mxu0 %v1250
        %v1650 = vpop.f32.mrb[0].mxu0
        %v1651 = vadd.f32 0.0, %v1650
        %v1652 = vpop.f32.mrb[0].mxu0
        %v1653 = vpop.f32.mrb[0].mxu0
        %v1654 = vadd.f32 0.0, %v1653
        %v1655 = vpop.f32.mrb[0].mxu0
        %1656 = vmatprep.mubr.bf16.mxu0 0
        %1657 = vmatmul.mubr.bf16.gmra.mrb[0].mxu0 %v1251
        %v1658 = vpop.f32.mrb[0].mxu0
        %v1659 = vadd.f32 0.0, %v1658
        %v1660 = vpop.f32.mrb[0].mxu0
        %v1661 = vpop.f32.mrb[0].mxu0
        %v1662 = vadd.f32 0.0, %v1661
        %v1663 = vpop.f32.mrb[0].mxu0
        %1664 = vmatprep.mubr.bf16.mxu0 0
        %1665 = vmatmul.mubr.bf16.gmra.mrb[0].mxu0 %v1252
        %v1666 = vpop.f32.mrb[0].mxu0
        %v1667 = vadd.f32 0.0, %v1666
        %v1668 = vpop.f32.mrb[0].mxu0
        %v1669 = vpop.f32.mrb[0].mxu0
        %v1670 = vadd.f32 0.0, %v1669
        %v1671 = vpop.f32.mrb[0].mxu0
        %1672 = vmatprep.mubr.bf16.mxu0 0
        %1673 = vmatmul.mubr.bf16.gmra.mrb[0].mxu0 %v1253
        %v1674 = vpop.f32.mrb[0].mxu0
        %v1675 = vadd.f32 0.0, %v1674
        %v1676 = vpop.f32.mrb[0].mxu0
        %v1677 = vpop.f32.mrb[0].mxu0
        %v1678 = vadd.f32 0.0, %v1677
        %v1679 = vpop.f32.mrb[0].mxu0
        %1680 = vmatprep.mubr.bf16.mxu0 0
        %1681 = vmatmul.mubr.bf16.gmra.mrb[0].mxu0 %v1254
        %v1682 = vpop.f32.mrb[0].mxu0
        %v1683 = vadd.f32 0.0, %v1682
        %v1684 = vpop.f32.mrb[0].mxu0
        %v1685 = vpop.f32.mrb[0].mxu0
        %v1686 = vadd.f32 0.0, %v1685
        %v1687 = vpop.f32.mrb[0].mxu0
        %1688 = vmatprep.mubr.bf16.mxu0 0
        %1689 = vmatmul.mubr.bf16.gmra.mrb[0].mxu0 %v1255
        %v1690 = vpop.f32.mrb[0].mxu0
        %v1691 = vadd.f32 0.0, %v1690
        %v1692 = vpop.f32.mrb[0].mxu0
        %v1693 = vpop.f32.mrb[0].mxu0
        %v1694 = vadd.f32 0.0, %v1693
        %v1695 = vpop.f32.mrb[0].mxu0
        %1696 = vmatprep.mubr.bf16.mxu0 0
        %1697 = vmatmul.mubr.bf16.gmra.mrb[0].mxu0 %v1256
        %v1698 = vpop.f32.mrb[0].mxu0
        %v1699 = vadd.f32 0.0, %v1698
        %v1700 = vpop.f32.mrb[0].mxu0
        %v1701 = vpop.f32.mrb[0].mxu0
        %v1702 = vadd.f32 0.0, %v1701
        %v1703 = vpop.f32.mrb[0].mxu0
        %1704 = vmatprep.mubr.bf16.mxu0 0
        %1705 = vmatmul.mubr.bf16.gmra.mrb[0].mxu0 %v1257
        %v1706 = vpop.f32.mrb[0].mxu0
        %v1707 = vadd.f32 0.0, %v1706
        %v1708 = vpop.f32.mrb[0].mxu0
        %v1709 = vpop.f32.mrb[0].mxu0
        %v1710 = vadd.f32 0.0, %v1709
        %v1711 = vpop.f32.mrb[0].mxu0
        %1712 = vmatprep.mubr.bf16.mxu0 0
        %1713 = vmatmul.mubr.bf16.gmra.mrb[0].mxu0 %v1258
        %v1714 = vpop.f32.mrb[0].mxu0
        %v1715 = vadd.f32 0.0, %v1714
        %v1716 = vpop.f32.mrb[0].mxu0
        %v1717 = vpop.f32.mrb[0].mxu0
        %v1718 = vadd.f32 0.0, %v1717
        %v1719 = vpop.f32.mrb[0].mxu0
        %1720 = vmatprep.mubr.bf16.mxu0 0
        %1721 = vmatmul.mubr.bf16.gmra.mrb[0].mxu0 %v1259
        %v1722 = vpop.f32.mrb[0].mxu0
        %v1723 = vadd.f32 0.0, %v1722
        %v1724 = vpop.f32.mrb[0].mxu0
        %v1725 = vpop.f32.mrb[0].mxu0
        %v1726 = vadd.f32 0.0, %v1725
        %v1727 = vpop.f32.mrb[0].mxu0
        %1728 = vmatprep.mubr.bf16.mxu0 0
        %1729 = vmatmul.mubr.bf16.gmra.mrb[0].mxu0 %v1260
        %v1730 = vpop.f32.mrb[0].mxu0
        %v1731 = vadd.f32 0.0, %v1730
        %v1732 = vpop.f32.mrb[0].mxu0
        %v1733 = vpop.f32.mrb[0].mxu0
        %v1734 = vadd.f32 0.0, %v1733
        %v1735 = vpop.f32.mrb[0].mxu0
        %1736 = vmatprep.mubr.bf16.mxu0 0
        %1737 = vmatmul.mubr.bf16.gmra.mrb[0].mxu0 %v1261
        %v1738 = vpop.f32.mrb[0].mxu0
        %v1739 = vadd.f32 0.0, %v1738
        %v1740 = vpop.f32.mrb[0].mxu0
        %v1741 = vpop.f32.mrb[0].mxu0
        %v1742 = vadd.f32 0.0, %v1741
        %v1743 = vpop.f32.mrb[0].mxu0
        %1744 = vmatprep.mubr.bf16.mxu0 0
        %1745 = vmatmul.mubr.bf16.gmra.mrb[0].mxu0 %v1262
        %v1746 = vpop.f32.mrb[0].mxu0
        %v1747 = vadd.f32 0.0, %v1746
        %v1748 = vpop.f32.mrb[0].mxu0
        %v1749 = vpop.f32.mrb[0].mxu0
        %v1750 = vadd.f32 0.0, %v1749
        %v1751 = vpop.f32.mrb[0].mxu0
        %1752 = vmatprep.mubr.bf16.mxu0 0
        %1753 = vmatmul.mubr.bf16.gmra.mrb[0].mxu0 %v1263
        %v1754 = vpop.f32.mrb[0].mxu0
        %v1755 = vadd.f32 0.0, %v1754
        %v1756 = vpop.f32.mrb[0].mxu0
        %v1757 = vpop.f32.mrb[0].mxu0
        %v1758 = vadd.f32 0.0, %v1757
        %v1759 = vpop.f32.mrb[0].mxu0
        %1760 = vmatprep.mubr.bf16.mxu0 0
        %1761 = vmatmul.mubr.bf16.gmra.mrb[0].mxu0 %v1264
        %v1762 = vpop.f32.mrb[0].mxu0
        %v1763 = vadd.f32 0.0, %v1762
        %v1764 = vpop.f32.mrb[0].mxu0
        %v1765 = vpop.f32.mrb[0].mxu0
        %v1766 = vadd.f32 0.0, %v1765
        %v1767 = vpop.f32.mrb[0].mxu0
        %1768 = vmatprep.mubr.bf16.mxu0 0
        %1769 = vmatmul.mubr.bf16.gmra.mrb[0].mxu0 %v1265
        %v1770 = vpop.f32.mrb[0].mxu0
        %v1771 = vadd.f32 0.0, %v1770
        %v1772 = vpop.f32.mrb[0].mxu0
        %v1773 = vpop.f32.mrb[0].mxu0
        %v1774 = vadd.f32 0.0, %v1773
        %v1775 = vpop.f32.mrb[0].mxu0
        %1776 = vmatprep.mubr.bf16.mxu0 0
        %1777 = vmatmul.mubr.bf16.gmra.mrb[0].mxu0 %v1266
        %v1778 = vpop.f32.mrb[0].mxu0
        %v1779 = vadd.f32 0.0, %v1778
        %v1780 = vpop.f32.mrb[0].mxu0
        %v1781 = vpop.f32.mrb[0].mxu0
        %v1782 = vadd.f32 0.0, %v1781
        %v1783 = vpop.f32.mrb[0].mxu0
        %1784 = vmatprep.mubr.bf16.mxu0 0
        %1785 = vmatmul.mubr.bf16.gmra.mrb[0].mxu0 %v1267
        %v1786 = vpop.f32.mrb[0].mxu0
        %v1787 = vadd.f32 0.0, %v1786
        %v1788 = vpop.f32.mrb[0].mxu0
        %v1789 = vpop.f32.mrb[0].mxu0
        %v1790 = vadd.f32 0.0, %v1789
        %v1791 = vpop.f32.mrb[0].mxu0
        %1792 = vmatprep.mubr.bf16.mxu0 0
        %1793 = vmatmul.mubr.bf16.gmra.mrb[0].mxu0 %v1268
        %v1794 = vpop.f32.mrb[0].mxu0
        %v1795 = vadd.f32 0.0, %v1794
        %v1796 = vpop.f32.mrb[0].mxu0
        %v1797 = vpop.f32.mrb[0].mxu0
        %v1798 = vadd.f32 0.0, %v1797
        %v1799 = vpop.f32.mrb[0].mxu0
        %1800 = vmatprep.mubr.bf16.mxu0 0
        %1801 = vmatmul.mubr.bf16.gmra.mrb[0].mxu0 %v1269
        %v1802 = vpop.f32.mrb[0].mxu0
        %v1803 = vadd.f32 0.0, %v1802
        %v1804 = vpop.f32.mrb[0].mxu0
        %v1805 = vpop.f32.mrb[0].mxu0
        %v1806 = vadd.f32 0.0, %v1805
        %v1807 = vpop.f32.mrb[0].mxu0
        %1808 = vmatprep.mubr.bf16.mxu0 0
        %1809 = vmatmul.mubr.bf16.gmra.mrb[0].mxu0 %v1270
        %v1810 = vpop.f32.mrb[0].mxu0
        %v1811 = vadd.f32 0.0, %v1810
        %v1812 = vpop.f32.mrb[0].mxu0
        %v1813 = vpop.f32.mrb[0].mxu0
        %v1814 = vadd.f32 0.0, %v1813
        %v1815 = vpop.f32.mrb[0].mxu0
        %1816 = vmatprep.mubr.bf16.mxu0 0
        %1817 = vmatmul.mubr.bf16.gmra.mrb[0].mxu0 %v1271
        %v1818 = vpop.f32.mrb[0].mxu0
        %v1819 = vadd.f32 0.0, %v1818
        %v1820 = vpop.f32.mrb[0].mxu0
        %v1821 = vpop.f32.mrb[0].mxu0
        %v1822 = vadd.f32 0.0, %v1821
        %v1823 = vpop.f32.mrb[0].mxu0
        %1824 = vmatprep.mubr.bf16.mxu0 0
        %1825 = vmatmul.mubr.bf16.gmra.mrb[0].mxu0 %v1272
        %v1826 = vpop.f32.mrb[0].mxu0
        %v1827 = vadd.f32 0.0, %v1826
        %v1828 = vpop.f32.mrb[0].mxu0
        %v1829 = vpop.f32.mrb[0].mxu0
        %v1830 = vadd.f32 0.0, %v1829
        %v1831 = vpop.f32.mrb[0].mxu0
        %1832 = vmatprep.mubr.bf16.mxu0 0
        %1833 = vmatmul.mubr.bf16.gmra.mrb[0].mxu0 %v1273
        %v1834 = vpop.f32.mrb[0].mxu0
        %v1835 = vadd.f32 0.0, %v1834
        %v1836 = vpop.f32.mrb[0].mxu0
        %v1837 = vpop.f32.mrb[0].mxu0
        %v1838 = vadd.f32 0.0, %v1837
        %v1839 = vpop.f32.mrb[0].mxu0
        %1840 = vmatprep.mubr.bf16.mxu0 0
        %1841 = vmatmul.mubr.bf16.gmra.mrb[0].mxu0 %v1274
        %v1842 = vpop.f32.mrb[0].mxu0
        %v1843 = vadd.f32 0.0, %v1842
        %v1844 = vpop.f32.mrb[0].mxu0
        %v1845 = vpop.f32.mrb[0].mxu0
        %v1846 = vadd.f32 0.0, %v1845
        %v1847 = vpop.f32.mrb[0].mxu0
        %1848 = vmatprep.mubr.bf16.mxu0 0
        %1849 = vmatmul.mubr.bf16.gmra.mrb[0].mxu0 %v1275
        %v1850 = vpop.f32.mrb[0].mxu0
        %v1851 = vadd.f32 0.0, %v1850
        %v1852 = vpop.f32.mrb[0].mxu0
        %v1853 = vpop.f32.mrb[0].mxu0
        %v1854 = vadd.f32 0.0, %v1853
        %v1855 = vpop.f32.mrb[0].mxu0
        %1856 = vmatprep.mubr.bf16.mxu0 0
        %1857 = vmatmul.mubr.bf16.gmra.mrb[0].mxu0 %v1276
        %v1858 = vpop.f32.mrb[0].mxu0
        %v1859 = vadd.f32 0.0, %v1858
        %v1860 = vpop.f32.mrb[0].mxu0
        %v1861 = vpop.f32.mrb[0].mxu0
        %v1862 = vadd.f32 0.0, %v1861
        %v1863 = vpop.f32.mrb[0].mxu0
        %1864 = vmatprep.mubr.bf16.mxu0 0
        %1865 = vmatmul.mubr.bf16.gmra.mrb[0].mxu0 %v1277
        %v1866 = vpop.f32.mrb[0].mxu0
        %v1867 = vadd.f32 0.0, %v1866
        %v1868 = vpop.f32.mrb[0].mxu0
        %v1869 = vpop.f32.mrb[0].mxu0
        %v1870 = vadd.f32 0.0, %v1869
        %v1871 = vpop.f32.mrb[0].mxu0
        %1872 = vmatprep.mubr.bf16.mxu0 0
        %1873 = vmatmul.mubr.bf16.gmra.mrb[0].mxu0 %v1278
        %v1874 = vpop.f32.mrb[0].mxu0
        %v1875 = vadd.f32 0.0, %v1874
        %v1876 = vpop.f32.mrb[0].mxu0
        %v1877 = vpop.f32.mrb[0].mxu0
        %v1878 = vadd.f32 0.0, %v1877
        %v1879 = vpop.f32.mrb[0].mxu0
        %1880 = vmatprep.mubr.bf16.mxu0 0
        %1881 = vmatmul.mubr.bf16.gmra.mrb[0].mxu0 %v1279
        %v1882 = vpop.f32.mrb[0].mxu0
        %v1883 = vadd.f32 0.0, %v1882
        %v1884 = vpop.f32.mrb[0].mxu0
        %v1885 = vpop.f32.mrb[0].mxu0
        %v1886 = vadd.f32 0.0, %v1885
        %v1887 = vpop.f32.mrb[0].mxu0
        %1888 = vdwg.mxu0
        %1889 = vmax.xlane.f32.xlu0 %v1379
        %v1890 = vpop.xlane.xlu0 %1889
        %1891 = vmax.xlane.f32.xlu0 %v1382
        %v1892 = vpop.xlane.xlu0 %1891
        %1893 = vmax.xlane.f32.xlu0 %v1387
        %v1894 = vpop.xlane.xlu0 %1893
        %1895 = vmax.xlane.f32.xlu0 %v1390
        %v1896 = vpop.xlane.xlu0 %1895
        %1897 = vmax.xlane.f32.xlu0 %v1395
        %v1898 = vpop.xlane.xlu0 %1897
        %1899 = vmax.xlane.f32.xlu0 %v1398
        %v1900 = vpop.xlane.xlu0 %1899
        %1901 = vmax.xlane.f32.xlu0 %v1403
        %v1902 = vpop.xlane.xlu0 %1901
        %1903 = vmax.xlane.f32.xlu0 %v1406
        %v1904 = vpop.xlane.xlu0 %1903
        %1905 = vmax.xlane.f32.xlu0 %v1411
        %v1906 = vpop.xlane.xlu0 %1905
        %1907 = vmax.xlane.f32.xlu0 %v1414
        %v1908 = vpop.xlane.xlu0 %1907
        %1909 = vmax.xlane.f32.xlu0 %v1419
        %v1910 = vpop.xlane.xlu0 %1909
        %1911 = vmax.xlane.f32.xlu0 %v1422
        %v1912 = vpop.xlane.xlu0 %1911
        %1913 = vmax.xlane.f32.xlu0 %v1427
        %v1914 = vpop.xlane.xlu0 %1913
        %1915 = vmax.xlane.f32.xlu0 %v1430
        %v1916 = vpop.xlane.xlu0 %1915
        %1917 = vmax.xlane.f32.xlu0 %v1435
        %v1918 = vpop.xlane.xlu0 %1917
        %1919 = vmax.xlane.f32.xlu0 %v1438
        %v1920 = vpop.xlane.xlu0 %1919
        %1921 = vmax.xlane.f32.xlu0 %v1443
        %v1922 = vpop.xlane.xlu0 %1921
        %1923 = vmax.xlane.f32.xlu0 %v1446
        %v1924 = vpop.xlane.xlu0 %1923
        %1925 = vmax.xlane.f32.xlu0 %v1451
        %v1926 = vpop.xlane.xlu0 %1925
        %1927 = vmax.xlane.f32.xlu0 %v1454
        %v1928 = vpop.xlane.xlu0 %1927
        %1929 = vmax.xlane.f32.xlu0 %v1459
        %v1930 = vpop.xlane.xlu0 %1929
        %1931 = vmax.xlane.f32.xlu0 %v1462
        %v1932 = vpop.xlane.xlu0 %1931
        %1933 = vmax.xlane.f32.xlu0 %v1467
        %v1934 = vpop.xlane.xlu0 %1933
        %1935 = vmax.xlane.f32.xlu0 %v1470
        %v1936 = vpop.xlane.xlu0 %1935
        %1937 = vmax.xlane.f32.xlu0 %v1475
        %v1938 = vpop.xlane.xlu0 %1937
        %1939 = vmax.xlane.f32.xlu0 %v1478
        %v1940 = vpop.xlane.xlu0 %1939
        %1941 = vmax.xlane.f32.xlu0 %v1483
        %v1942 = vpop.xlane.xlu0 %1941
        %1943 = vmax.xlane.f32.xlu0 %v1486
        %v1944 = vpop.xlane.xlu0 %1943
        %1945 = vmax.xlane.f32.xlu0 %v1491
        %v1946 = vpop.xlane.xlu0 %1945
        %1947 = vmax.xlane.f32.xlu0 %v1494
        %v1948 = vpop.xlane.xlu0 %1947
        %1949 = vmax.xlane.f32.xlu0 %v1499
        %v1950 = vpop.xlane.xlu0 %1949
        %1951 = vmax.xlane.f32.xlu0 %v1502
        %v1952 = vpop.xlane.xlu0 %1951
        %1953 = vmax.xlane.f32.xlu0 %v1507
        %v1954 = vpop.xlane.xlu0 %1953
        %1955 = vmax.xlane.f32.xlu0 %v1510
        %v1956 = vpop.xlane.xlu0 %1955
        %1957 = vmax.xlane.f32.xlu0 %v1515
        %v1958 = vpop.xlane.xlu0 %1957
        %1959 = vmax.xlane.f32.xlu0 %v1518
        %v1960 = vpop.xlane.xlu0 %1959
        %1961 = vmax.xlane.f32.xlu0 %v1523
        %v1962 = vpop.xlane.xlu0 %1961
        %1963 = vmax.xlane.f32.xlu0 %v1526
        %v1964 = vpop.xlane.xlu0 %1963
        %1965 = vmax.xlane.f32.xlu0 %v1531
        %v1966 = vpop.xlane.xlu0 %1965
        %1967 = vmax.xlane.f32.xlu0 %v1534
        %v1968 = vpop.xlane.xlu0 %1967
        %1969 = vmax.xlane.f32.xlu0 %v1539
        %v1970 = vpop.xlane.xlu0 %1969
        %1971 = vmax.xlane.f32.xlu0 %v1542
        %v1972 = vpop.xlane.xlu0 %1971
        %1973 = vmax.xlane.f32.xlu0 %v1547
        %v1974 = vpop.xlane.xlu0 %1973
        %1975 = vmax.xlane.f32.xlu0 %v1550
        %v1976 = vpop.xlane.xlu0 %1975
        %1977 = vmax.xlane.f32.xlu0 %v1555
        %v1978 = vpop.xlane.xlu0 %1977
        %1979 = vmax.xlane.f32.xlu0 %v1558
        %v1980 = vpop.xlane.xlu0 %1979
        %1981 = vmax.xlane.f32.xlu0 %v1563
        %v1982 = vpop.xlane.xlu0 %1981
        %1983 = vmax.xlane.f32.xlu0 %v1566
        %v1984 = vpop.xlane.xlu0 %1983
        %1985 = vmax.xlane.f32.xlu0 %v1571
        %v1986 = vpop.xlane.xlu0 %1985
        %1987 = vmax.xlane.f32.xlu0 %v1574
        %v1988 = vpop.xlane.xlu0 %1987
        %1989 = vmax.xlane.f32.xlu0 %v1579
        %v1990 = vpop.xlane.xlu0 %1989
        %1991 = vmax.xlane.f32.xlu0 %v1582
        %v1992 = vpop.xlane.xlu0 %1991
        %1993 = vmax.xlane.f32.xlu0 %v1587
        %v1994 = vpop.xlane.xlu0 %1993
        %1995 = vmax.xlane.f32.xlu0 %v1590
        %v1996 = vpop.xlane.xlu0 %1995
        %1997 = vmax.xlane.f32.xlu0 %v1595
        %v1998 = vpop.xlane.xlu0 %1997
        %1999 = vmax.xlane.f32.xlu0 %v1598
        %v2000 = vpop.xlane.xlu0 %1999
        %2001 = vmax.xlane.f32.xlu0 %v1603
        %v2002 = vpop.xlane.xlu0 %2001
        %2003 = vmax.xlane.f32.xlu0 %v1606
        %v2004 = vpop.xlane.xlu0 %2003
        %2005 = vmax.xlane.f32.xlu0 %v1611
        %v2006 = vpop.xlane.xlu0 %2005
        %2007 = vmax.xlane.f32.xlu0 %v1614
        %v2008 = vpop.xlane.xlu0 %2007
        %2009 = vmax.xlane.f32.xlu0 %v1619
        %v2010 = vpop.xlane.xlu0 %2009
        %2011 = vmax.xlane.f32.xlu0 %v1622
        %v2012 = vpop.xlane.xlu0 %2011
        %2013 = vmax.xlane.f32.xlu0 %v1627
        %v2014 = vpop.xlane.xlu0 %2013
        %2015 = vmax.xlane.f32.xlu0 %v1630
        %v2016 = vpop.xlane.xlu0 %2015
        %2017 = vmax.xlane.f32.xlu0 %v1635
        %v2018 = vpop.xlane.xlu0 %2017
        %2019 = vmax.xlane.f32.xlu0 %v1638
        %v2020 = vpop.xlane.xlu0 %2019
        %2021 = vmax.xlane.f32.xlu0 %v1643
        %v2022 = vpop.xlane.xlu0 %2021
        %2023 = vmax.xlane.f32.xlu0 %v1646
        %v2024 = vpop.xlane.xlu0 %2023
        %2025 = vmax.xlane.f32.xlu0 %v1651
        %v2026 = vpop.xlane.xlu0 %2025
        %2027 = vmax.xlane.f32.xlu0 %v1654
        %v2028 = vpop.xlane.xlu0 %2027
        %2029 = vmax.xlane.f32.xlu0 %v1659
        %v2030 = vpop.xlane.xlu0 %2029
        %2031 = vmax.xlane.f32.xlu0 %v1662
        %v2032 = vpop.xlane.xlu0 %2031
        %2033 = vmax.xlane.f32.xlu0 %v1667
        %v2034 = vpop.xlane.xlu0 %2033
        %2035 = vmax.xlane.f32.xlu0 %v1670
        %v2036 = vpop.xlane.xlu0 %2035
        %2037 = vmax.xlane.f32.xlu0 %v1675
        %v2038 = vpop.xlane.xlu0 %2037
        %2039 = vmax.xlane.f32.xlu0 %v1678
        %v2040 = vpop.xlane.xlu0 %2039
        %2041 = vmax.xlane.f32.xlu0 %v1683
        %v2042 = vpop.xlane.xlu0 %2041
        %2043 = vmax.xlane.f32.xlu0 %v1686
        %v2044 = vpop.xlane.xlu0 %2043
        %2045 = vmax.xlane.f32.xlu0 %v1691
        %v2046 = vpop.xlane.xlu0 %2045
        %2047 = vmax.xlane.f32.xlu0 %v1694
        %v2048 = vpop.xlane.xlu0 %2047
        %2049 = vmax.xlane.f32.xlu0 %v1699
        %v2050 = vpop.xlane.xlu0 %2049
        %2051 = vmax.xlane.f32.xlu0 %v1702
        %v2052 = vpop.xlane.xlu0 %2051
        %2053 = vmax.xlane.f32.xlu0 %v1707
        %v2054 = vpop.xlane.xlu0 %2053
        %2055 = vmax.xlane.f32.xlu0 %v1710
        %v2056 = vpop.xlane.xlu0 %2055
        %2057 = vmax.xlane.f32.xlu0 %v1715
        %v2058 = vpop.xlane.xlu0 %2057
        %2059 = vmax.xlane.f32.xlu0 %v1718
        %v2060 = vpop.xlane.xlu0 %2059
        %2061 = vmax.xlane.f32.xlu0 %v1723
        %v2062 = vpop.xlane.xlu0 %2061
        %2063 = vmax.xlane.f32.xlu0 %v1726
        %v2064 = vpop.xlane.xlu0 %2063
        %2065 = vmax.xlane.f32.xlu0 %v1731
        %v2066 = vpop.xlane.xlu0 %2065
        %2067 = vmax.xlane.f32.xlu0 %v1734
        %v2068 = vpop.xlane.xlu0 %2067
        %2069 = vmax.xlane.f32.xlu0 %v1739
        %v2070 = vpop.xlane.xlu0 %2069
        %2071 = vmax.xlane.f32.xlu0 %v1742
        %v2072 = vpop.xlane.xlu0 %2071
        %2073 = vmax.xlane.f32.xlu0 %v1747
        %v2074 = vpop.xlane.xlu0 %2073
        %2075 = vmax.xlane.f32.xlu0 %v1750
        %v2076 = vpop.xlane.xlu0 %2075
        %2077 = vmax.xlane.f32.xlu0 %v1755
        %v2078 = vpop.xlane.xlu0 %2077
        %2079 = vmax.xlane.f32.xlu0 %v1758
        %v2080 = vpop.xlane.xlu0 %2079
        %2081 = vmax.xlane.f32.xlu0 %v1763
        %v2082 = vpop.xlane.xlu0 %2081
        %2083 = vmax.xlane.f32.xlu0 %v1766
        %v2084 = vpop.xlane.xlu0 %2083
        %2085 = vmax.xlane.f32.xlu0 %v1771
        %v2086 = vpop.xlane.xlu0 %2085
        %2087 = vmax.xlane.f32.xlu0 %v1774
        %v2088 = vpop.xlane.xlu0 %2087
        %2089 = vmax.xlane.f32.xlu0 %v1779
        %v2090 = vpop.xlane.xlu0 %2089
        %2091 = vmax.xlane.f32.xlu0 %v1782
        %v2092 = vpop.xlane.xlu0 %2091
        %2093 = vmax.xlane.f32.xlu0 %v1787
        %v2094 = vpop.xlane.xlu0 %2093
        %2095 = vmax.xlane.f32.xlu0 %v1790
        %v2096 = vpop.xlane.xlu0 %2095
        %2097 = vmax.xlane.f32.xlu0 %v1795
        %v2098 = vpop.xlane.xlu0 %2097
        %2099 = vmax.xlane.f32.xlu0 %v1798
        %v2100 = vpop.xlane.xlu0 %2099
        %2101 = vmax.xlane.f32.xlu0 %v1803
        %v2102 = vpop.xlane.xlu0 %2101
        %2103 = vmax.xlane.f32.xlu0 %v1806
        %v2104 = vpop.xlane.xlu0 %2103
        %2105 = vmax.xlane.f32.xlu0 %v1811
        %v2106 = vpop.xlane.xlu0 %2105
        %2107 = vmax.xlane.f32.xlu0 %v1814
        %v2108 = vpop.xlane.xlu0 %2107
        %2109 = vmax.xlane.f32.xlu0 %v1819
        %v2110 = vpop.xlane.xlu0 %2109
        %2111 = vmax.xlane.f32.xlu0 %v1822
        %v2112 = vpop.xlane.xlu0 %2111
        %2113 = vmax.xlane.f32.xlu0 %v1827
        %v2114 = vpop.xlane.xlu0 %2113
        %2115 = vmax.xlane.f32.xlu0 %v1830
        %v2116 = vpop.xlane.xlu0 %2115
        %2117 = vmax.xlane.f32.xlu0 %v1835
        %v2118 = vpop.xlane.xlu0 %2117
        %2119 = vmax.xlane.f32.xlu0 %v1838
        %v2120 = vpop.xlane.xlu0 %2119
        %2121 = vmax.xlane.f32.xlu0 %v1843
        %v2122 = vpop.xlane.xlu0 %2121
        %2123 = vmax.xlane.f32.xlu0 %v1846
        %v2124 = vpop.xlane.xlu0 %2123
        %2125 = vmax.xlane.f32.xlu0 %v1851
        %v2126 = vpop.xlane.xlu0 %2125
        %2127 = vmax.xlane.f32.xlu0 %v1854
        %v2128 = vpop.xlane.xlu0 %2127
        %2129 = vmax.xlane.f32.xlu0 %v1859
        %v2130 = vpop.xlane.xlu0 %2129
        %2131 = vmax.xlane.f32.xlu0 %v1862
        %v2132 = vpop.xlane.xlu0 %2131
        %2133 = vmax.xlane.f32.xlu0 %v1867
        %v2134 = vpop.xlane.xlu0 %2133
        %2135 = vmax.xlane.f32.xlu0 %v1870
        %v2136 = vpop.xlane.xlu0 %2135
        %2137 = vmax.xlane.f32.xlu0 %v1875
        %v2138 = vpop.xlane.xlu0 %2137
        %2139 = vmax.xlane.f32.xlu0 %v1878
        %v2140 = vpop.xlane.xlu0 %2139
        %2141 = vmax.xlane.f32.xlu0 %v1883
        %v2142 = vpop.xlane.xlu0 %2141
        %2143 = vmax.xlane.f32.xlu0 %v1886
        %v2144 = vpop.xlane.xlu0 %2143
        %vm2145 = vcmask 7168
        %2146 = vst.msk [vmem:[%s299] sm:$0xff] %vm2145, %v1890
        %2147 = vst.msk [vmem:[%s299 + $0x8] sm:$0xff] %vm2145, %v1892
        %2148 = vst.msk [vmem:[%s299 + $0x10] sm:$0xff] %vm2145, %v1894
        %2149 = vst.msk [vmem:[%s299 + $0x18] sm:$0xff] %vm2145, %v1896
        %2150 = vst.msk [vmem:[%s299 + $0x20] sm:$0xff] %vm2145, %v1898
        %2151 = vst.msk [vmem:[%s299 + $0x28] sm:$0xff] %vm2145, %v1900
        %2152 = vst.msk [vmem:[%s299 + $0x30] sm:$0xff] %vm2145, %v1902
        %2153 = vst.msk [vmem:[%s299 + $0x38] sm:$0xff] %vm2145, %v1904
        %2154 = vst.msk [vmem:[%s299 + $0x40] sm:$0xff] %vm2145, %v1906
        %2155 = vst.msk [vmem:[%s299 + $0x48] sm:$0xff] %vm2145, %v1908
        %2156 = vst.msk [vmem:[%s299 + $0x50] sm:$0xff] %vm2145, %v1910
        %2157 = vst.msk [vmem:[%s299 + $0x58] sm:$0xff] %vm2145, %v1912
        %2158 = vst.msk [vmem:[%s299 + $0x60] sm:$0xff] %vm2145, %v1914
        %2159 = vst.msk [vmem:[%s299 + $0x68] sm:$0xff] %vm2145, %v1916
        %2160 = vst.msk [vmem:[%s299 + $0x70] sm:$0xff] %vm2145, %v1918
        %2161 = vst.msk [vmem:[%s299 + $0x78] sm:$0xff] %vm2145, %v1920
        %2162 = vst.msk [vmem:[%s299 + $0x80] sm:$0xff] %vm2145, %v1922
        %2163 = vst.msk [vmem:[%s299 + $0x88] sm:$0xff] %vm2145, %v1924
        %2164 = vst.msk [vmem:[%s299 + $0x90] sm:$0xff] %vm2145, %v1926
        %2165 = vst.msk [vmem:[%s299 + $0x98] sm:$0xff] %vm2145, %v1928
        %2166 = vst.msk [vmem:[%s299 + $0xa0] sm:$0xff] %vm2145, %v1930
        %2167 = vst.msk [vmem:[%s299 + $0xa8] sm:$0xff] %vm2145, %v1932
        %2168 = vst.msk [vmem:[%s299 + $0xb0] sm:$0xff] %vm2145, %v1934
        %2169 = vst.msk [vmem:[%s299 + $0xb8] sm:$0xff] %vm2145, %v1936
        %2170 = vst.msk [vmem:[%s299 + $0xc0] sm:$0xff] %vm2145, %v1938
        %2171 = vst.msk [vmem:[%s299 + $0xc8] sm:$0xff] %vm2145, %v1940
        %2172 = vst.msk [vmem:[%s299 + $0xd0] sm:$0xff] %vm2145, %v1942
        %2173 = vst.msk [vmem:[%s299 + $0xd8] sm:$0xff] %vm2145, %v1944
        %2174 = vst.msk [vmem:[%s299 + $0xe0] sm:$0xff] %vm2145, %v1946
        %2175 = vst.msk [vmem:[%s299 + $0xe8] sm:$0xff] %vm2145, %v1948
        %2176 = vst.msk [vmem:[%s299 + $0xf0] sm:$0xff] %vm2145, %v1950
        %2177 = vst.msk [vmem:[%s299 + $0xf8] sm:$0xff] %vm2145, %v1952
        %2178 = vst.msk [vmem:[%s299 + $0x100] sm:$0xff] %vm2145, %v1954
        %2179 = vst.msk [vmem:[%s299 + $0x108] sm:$0xff] %vm2145, %v1956
        %2180 = vst.msk [vmem:[%s299 + $0x110] sm:$0xff] %vm2145, %v1958
        %2181 = vst.msk [vmem:[%s299 + $0x118] sm:$0xff] %vm2145, %v1960
        %2182 = vst.msk [vmem:[%s299 + $0x120] sm:$0xff] %vm2145, %v1962
        %2183 = vst.msk [vmem:[%s299 + $0x128] sm:$0xff] %vm2145, %v1964
        %2184 = vst.msk [vmem:[%s299 + $0x130] sm:$0xff] %vm2145, %v1966
        %2185 = vst.msk [vmem:[%s299 + $0x138] sm:$0xff] %vm2145, %v1968
        %2186 = vst.msk [vmem:[%s299 + $0x140] sm:$0xff] %vm2145, %v1970
        %2187 = vst.msk [vmem:[%s299 + $0x148] sm:$0xff] %vm2145, %v1972
        %2188 = vst.msk [vmem:[%s299 + $0x150] sm:$0xff] %vm2145, %v1974
        %2189 = vst.msk [vmem:[%s299 + $0x158] sm:$0xff] %vm2145, %v1976
        %2190 = vst.msk [vmem:[%s299 + $0x160] sm:$0xff] %vm2145, %v1978
        %2191 = vst.msk [vmem:[%s299 + $0x168] sm:$0xff] %vm2145, %v1980
        %2192 = vst.msk [vmem:[%s299 + $0x170] sm:$0xff] %vm2145, %v1982
        %2193 = vst.msk [vmem:[%s299 + $0x178] sm:$0xff] %vm2145, %v1984
        %2194 = vst.msk [vmem:[%s299 + $0x180] sm:$0xff] %vm2145, %v1986
        %2195 = vst.msk [vmem:[%s299 + $0x188] sm:$0xff] %vm2145, %v1988
        %2196 = vst.msk [vmem:[%s299 + $0x190] sm:$0xff] %vm2145, %v1990
        %2197 = vst.msk [vmem:[%s299 + $0x198] sm:$0xff] %vm2145, %v1992
        %2198 = vst.msk [vmem:[%s299 + $0x1a0] sm:$0xff] %vm2145, %v1994
        %2199 = vst.msk [vmem:[%s299 + $0x1a8] sm:$0xff] %vm2145, %v1996
        %2200 = vst.msk [vmem:[%s299 + $0x1b0] sm:$0xff] %vm2145, %v1998
        %2201 = vst.msk [vmem:[%s299 + $0x1b8] sm:$0xff] %vm2145, %v2000
        %2202 = vst.msk [vmem:[%s299 + $0x1c0] sm:$0xff] %vm2145, %v2002
        %2203 = vst.msk [vmem:[%s299 + $0x1c8] sm:$0xff] %vm2145, %v2004
        %2204 = vst.msk [vmem:[%s299 + $0x1d0] sm:$0xff] %vm2145, %v2006
        %2205 = vst.msk [vmem:[%s299 + $0x1d8] sm:$0xff] %vm2145, %v2008
        %2206 = vst.msk [vmem:[%s299 + $0x1e0] sm:$0xff] %vm2145, %v2010
        %2207 = vst.msk [vmem:[%s299 + $0x1e8] sm:$0xff] %vm2145, %v2012
        %2208 = vst.msk [vmem:[%s299 + $0x1f0] sm:$0xff] %vm2145, %v2014
        %2209 = vst.msk [vmem:[%s299 + $0x1f8] sm:$0xff] %vm2145, %v2016
        %2210 = vst.msk [vmem:[%s299 + $0x200] sm:$0xff] %vm2145, %v2018
        %2211 = vst.msk [vmem:[%s299 + $0x208] sm:$0xff] %vm2145, %v2020
        %2212 = vst.msk [vmem:[%s299 + $0x210] sm:$0xff] %vm2145, %v2022
        %2213 = vst.msk [vmem:[%s299 + $0x218] sm:$0xff] %vm2145, %v2024
        %2214 = vst.msk [vmem:[%s299 + $0x220] sm:$0xff] %vm2145, %v2026
        %2215 = vst.msk [vmem:[%s299 + $0x228] sm:$0xff] %vm2145, %v2028
        %2216 = vst.msk [vmem:[%s299 + $0x230] sm:$0xff] %vm2145, %v2030
        %2217 = vst.msk [vmem:[%s299 + $0x238] sm:$0xff] %vm2145, %v2032
        %2218 = vst.msk [vmem:[%s299 + $0x240] sm:$0xff] %vm2145, %v2034
        %2219 = vst.msk [vmem:[%s299 + $0x248] sm:$0xff] %vm2145, %v2036
        %2220 = vst.msk [vmem:[%s299 + $0x250] sm:$0xff] %vm2145, %v2038
        %2221 = vst.msk [vmem:[%s299 + $0x258] sm:$0xff] %vm2145, %v2040
        %2222 = vst.msk [vmem:[%s299 + $0x260] sm:$0xff] %vm2145, %v2042
        %2223 = vst.msk [vmem:[%s299 + $0x268] sm:$0xff] %vm2145, %v2044
        %2224 = vst.msk [vmem:[%s299 + $0x270] sm:$0xff] %vm2145, %v2046
        %2225 = vst.msk [vmem:[%s299 + $0x278] sm:$0xff] %vm2145, %v2048
        %2226 = vst.msk [vmem:[%s299 + $0x280] sm:$0xff] %vm2145, %v2050
        %2227 = vst.msk [vmem:[%s299 + $0x288] sm:$0xff] %vm2145, %v2052
        %2228 = vst.msk [vmem:[%s299 + $0x290] sm:$0xff] %vm2145, %v2054
        %2229 = vst.msk [vmem:[%s299 + $0x298] sm:$0xff] %vm2145, %v2056
        %2230 = vst.msk [vmem:[%s299 + $0x2a0] sm:$0xff] %vm2145, %v2058
        %2231 = vst.msk [vmem:[%s299 + $0x2a8] sm:$0xff] %vm2145, %v2060
        %2232 = vst.msk [vmem:[%s299 + $0x2b0] sm:$0xff] %vm2145, %v2062
        %2233 = vst.msk [vmem:[%s299 + $0x2b8] sm:$0xff] %vm2145, %v2064
        %2234 = vst.msk [vmem:[%s299 + $0x2c0] sm:$0xff] %vm2145, %v2066
        %2235 = vst.msk [vmem:[%s299 + $0x2c8] sm:$0xff] %vm2145, %v2068
        %2236 = vst.msk [vmem:[%s299 + $0x2d0] sm:$0xff] %vm2145, %v2070
        %2237 = vst.msk [vmem:[%s299 + $0x2d8] sm:$0xff] %vm2145, %v2072
        %2238 = vst.msk [vmem:[%s299 + $0x2e0] sm:$0xff] %vm2145, %v2074
        %2239 = vst.msk [vmem:[%s299 + $0x2e8] sm:$0xff] %vm2145, %v2076
        %2240 = vst.msk [vmem:[%s299 + $0x2f0] sm:$0xff] %vm2145, %v2078
        %2241 = vst.msk [vmem:[%s299 + $0x2f8] sm:$0xff] %vm2145, %v2080
        %2242 = vst.msk [vmem:[%s299 + $0x300] sm:$0xff] %vm2145, %v2082
        %2243 = vst.msk [vmem:[%s299 + $0x308] sm:$0xff] %vm2145, %v2084
        %2244 = vst.msk [vmem:[%s299 + $0x310] sm:$0xff] %vm2145, %v2086
        %2245 = vst.msk [vmem:[%s299 + $0x318] sm:$0xff] %vm2145, %v2088
        %2246 = vst.msk [vmem:[%s299 + $0x320] sm:$0xff] %vm2145, %v2090
        %2247 = vst.msk [vmem:[%s299 + $0x328] sm:$0xff] %vm2145, %v2092
        %2248 = vst.msk [vmem:[%s299 + $0x330] sm:$0xff] %vm2145, %v2094
        %2249 = vst.msk [vmem:[%s299 + $0x338] sm:$0xff] %vm2145, %v2096
        %2250 = vst.msk [vmem:[%s299 + $0x340] sm:$0xff] %vm2145, %v2098
        %2251 = vst.msk [vmem:[%s299 + $0x348] sm:$0xff] %vm2145, %v2100
        %2252 = vst.msk [vmem:[%s299 + $0x350] sm:$0xff] %vm2145, %v2102
        %2253 = vst.msk [vmem:[%s299 + $0x358] sm:$0xff] %vm2145, %v2104
        %2254 = vst.msk [vmem:[%s299 + $0x360] sm:$0xff] %vm2145, %v2106
        %2255 = vst.msk [vmem:[%s299 + $0x368] sm:$0xff] %vm2145, %v2108
        %2256 = vst.msk [vmem:[%s299 + $0x370] sm:$0xff] %vm2145, %v2110
        %2257 = vst.msk [vmem:[%s299 + $0x378] sm:$0xff] %vm2145, %v2112
        %2258 = vst.msk [vmem:[%s299 + $0x380] sm:$0xff] %vm2145, %v2114
        %2259 = vst.msk [vmem:[%s299 + $0x388] sm:$0xff] %vm2145, %v2116
        %2260 = vst.msk [vmem:[%s299 + $0x390] sm:$0xff] %vm2145, %v2118
        %2261 = vst.msk [vmem:[%s299 + $0x398] sm:$0xff] %vm2145, %v2120
        %2262 = vst.msk [vmem:[%s299 + $0x3a0] sm:$0xff] %vm2145, %v2122
        %2263 = vst.msk [vmem:[%s299 + $0x3a8] sm:$0xff] %vm2145, %v2124
        %2264 = vst.msk [vmem:[%s299 + $0x3b0] sm:$0xff] %vm2145, %v2126
        %2265 = vst.msk [vmem:[%s299 + $0x3b8] sm:$0xff] %vm2145, %v2128
        %2266 = vst.msk [vmem:[%s299 + $0x3c0] sm:$0xff] %vm2145, %v2130
        %2267 = vst.msk [vmem:[%s299 + $0x3c8] sm:$0xff] %vm2145, %v2132
        %2268 = vst.msk [vmem:[%s299 + $0x3d0] sm:$0xff] %vm2145, %v2134
        %2269 = vst.msk [vmem:[%s299 + $0x3d8] sm:$0xff] %vm2145, %v2136
        %2270 = vst.msk [vmem:[%s299 + $0x3e0] sm:$0xff] %vm2145, %v2138
        %2271 = vst.msk [vmem:[%s299 + $0x3e8] sm:$0xff] %vm2145, %v2140
        %2272 = vst.msk [vmem:[%s299 + $0x3f0] sm:$0xff] %vm2145, %v2142
        %2273 = vst.msk [vmem:[%s299 + $0x3f8] sm:$0xff] %vm2145, %v2144
        %p2274 = scmp.lt.s32.totalorder %s22, 1
        %s2275 = scalar_select %p2274, %s22, 1
        %p2276 = scmp.lt.s32.totalorder %s23, 2
        %s2277 = scalar_select %p2276, %s23, 2
        %s2278 = smul.addr %s2277, 128
        %s2279 = smul.addr %s2275, 384
        %s2280 = sadd.s32 %s2278, %s2279
        %s2281 = smul.addr %s2280, 8
        %s2282 = scalar_lea.vmem %s6, %s2281
        // Predicated region
        $region49: #{tpu_custom_call.1} parent=43 // pred_check
          %p2283 = pneg %p183
        $region50: #{tpu_custom_call.1} parent=43 // pred_check_branch
          %2285 = sbr.rel (%p2283) target = $region52
        $region51: #{tpu_custom_call.1} parent=43 // pred_region
          _
        $region52: #{tpu_custom_call.1} parent=43 // pred_fallthru
          _
      $region44: #{tpu_custom_call.1} parent=5 // pred_fallthru
        _
      %p2286 = scmp.le.s32.totalorder 2, %s13
      // Predicated region
      $region53: #{tpu_custom_call.1} parent=5 // pred_check
        %p2287 = pneg %p2286
      $region54: #{tpu_custom_call.1} parent=5 // pred_check_branch
        %2289 = sbr.rel (%p2287) target = $region56
      $region55: #{tpu_custom_call.1} parent=5 // pred_region
        %s2290 = ssub.s32 %s13, 2
        // Predicated region
        $region57: #{tpu_custom_call.1} parent=55 // pred_check
          %p2291 = pneg %p189
        $region58: #{tpu_custom_call.1} parent=55 // pred_check_branch
          %2293 = sbr.rel (%p2291) target = $region60
        $region59: #{tpu_custom_call.1} parent=55 // pred_region
          %p2294 = scmp.lt.s32.totalorder %s24, 1
          %s2295 = scalar_select %p2294, %s24, 1
          %p2296 = scmp.lt.s32.totalorder %s25, 2
          %s2297 = scalar_select %p2296, %s25, 2
          %s2298 = smul.addr %s2297, 128
          %s2299 = smul.addr %s2295, 384
          %s2300 = sadd.s32 %s2298, %s2299
          %s2301 = smul.addr %s2300, 8
          %s2302 = scalar_lea.vmem %s6, %s2301
        $region60: #{tpu_custom_call.1} parent=55 // pred_fallthru
          _
      $region56: #{tpu_custom_call.1} parent=5 // pred_fallthru
        _
    $region6: #{tpu_custom_call.1} parent=1 // loop_footer
      %s17 = sadd.s32 1, %s13
    $region7: #{tpu_custom_call.1} parent=1 // loop_footer_branch
      %12 = sbr.rel target = $region3
    $region8: #{tpu_custom_call.1} parent=1 // loop_exit
      _
    %2303 = vsyncpa [#allocation3], 1
    %s2304 = scalar_lea.sflag [#allocation3], 1
    %2305 = vsyncpa %s2304, 1

</llo_original>
